<compile_context>
chip_gen: v5e
topology: v5e:2x2
jax: 0.10.0
libtpu: 0.0.40
codegen_flags: <defaults>
</compile_context>

<pallas_src>
import jax
import jax.numpy as jnp
from jax.experimental import pallas as pl
from jax.experimental.pallas import tpu as pltpu


# ----------------------------------------------------------------------------
# Fused kernel: input projection + LSTM recurrence + final classifier
# ----------------------------------------------------------------------------
def lstm_fused_kernel(x_ref, w_ih_ref, w_hh_ref, b_ref, w_c_ref, b_c_ref,
                      out_ref, h_sc, c_sc):
    """One grid step == one (batch-tile, time-chunk).

    x_ref   : (Bt, Tc, D) bf16  raw input block (batch-first layout, no
                                wrapper-side transpose)
    w_ih_ref: (D, 4H)     bf16  input-to-hidden weights (gate order i,f,g,o)
    w_hh_ref: (H, 4H)     bf16  hidden-to-hidden weights
    b_ref   : (1, 4H)     f32   b_ih + b_hh
    w_c_ref : (H, Cp)     bf16  classifier weight (lane-padded)
    b_c_ref : (1, Cp)     f32   classifier bias   (lane-padded)
    out_ref : (Bt, Cp)    f32   logits, written only on the last time chunk
    h_sc,c_sc:(Bt, H)     f32   VMEM scratch carrying LSTM state across chunks
    """
    t_chunk = pl.program_id(1)
    Tc = x_ref.shape[1]
    H = h_sc.shape[-1]

    @pl.when(t_chunk == 0)
    def _init():
        h_sc[...] = jnp.zeros_like(h_sc)
        c_sc[...] = jnp.zeros_like(c_sc)

    # Hoist grid-invariant loads out of the timestep loop.
    w_ih = w_ih_ref[...]
    w_hh = w_hh_ref[...]
    bias = b_ref[...]

    h = h_sc[...]
    c = c_sc[...]

    # Fully-unrolled static timestep loop.  The x @ W_ih projection does not
    # depend on the recurrent state, so in the unrolled trace the scheduler
    # overlaps it with the serial h @ W_hh chain -- and, being fused here,
    # the gate tensor never touches HBM.
    for s in range(Tc):
        x_s = x_ref[:, s, :]                                    # (Bt, D) bf16
        gates = (jnp.dot(x_s, w_ih, preferred_element_type=jnp.float32)
                 + bias
                 + jnp.dot(h.astype(jnp.bfloat16), w_hh,
                           preferred_element_type=jnp.float32))
        # Lane-aligned per-gate slices (H is a multiple of 128).
        i_g = jax.nn.sigmoid(gates[:, 0 * H:1 * H])
        f_g = jax.nn.sigmoid(gates[:, 1 * H:2 * H])
        g_g = jnp.tanh(gates[:, 2 * H:3 * H])
        o_g = jax.nn.sigmoid(gates[:, 3 * H:4 * H])
        c = f_g * c + i_g * g_g
        h = o_g * jnp.tanh(c)

    h_sc[...] = h
    c_sc[...] = c

    @pl.when(t_chunk == pl.num_programs(1) - 1)
    def _final():
        logits = (jnp.dot(h.astype(jnp.bfloat16), w_c_ref[...],
                          preferred_element_type=jnp.float32)
                  + b_c_ref[...])
        out_ref[...] = logits.astype(out_ref.dtype)


# ----------------------------------------------------------------------------
# Tiling helpers
# ----------------------------------------------------------------------------
def _round_up(n, m):
    return ((n + m - 1) // m) * m


def _largest_divisor(n, cap, multiple):
    """Largest divisor of n that is a multiple of `multiple` and <= cap."""
    best = None
    for d in range(multiple, min(n, cap) + 1, multiple):
        if n % d == 0:
            best = d
    return best


def _pick_tiles(B_pad, T, D, H):
    # Batch tile: up to 256 rows (fills the v6e/v7x 256-row MXU), but keep at
    # least two batch tiles when the batch allows so the "parallel" grid axis
    # actually splits across the two v7x TensorCores / megacore.
    bt_cap = 256
    if B_pad >= 16:
        bt_cap = min(bt_cap, B_pad // 2)
    Bt = _largest_divisor(B_pad, bt_cap, 8) or 8

    # Time chunk: a multiple of 8 dividing T (layout-legal (Tc, D) block),
    # sized so the double-buffered bf16 x block plus the in-kernel f32 gate
    # temporaries stay well inside v7x's 64 MiB VMEM.
    budget = 24 * 1024 * 1024

    def fits(tc):
        x_bytes = 2 * Bt * tc * D * 2          # double-buffered bf16 input
        g_bytes = Bt * tc * 4 * H * 4          # f32 gate temporaries
        return x_bytes + g_bytes <= budget

    Tc = None
    for d in range(8, T + 1, 8):
        if T % d == 0 and fits(d):
            Tc = d
    if Tc is None:
        # Degenerate T (no multiple-of-8 divisor): take the whole sequence as
        # one chunk -- a block dim equal to the full array dim is always legal.
        Tc = T
    return Bt, Tc


# ----------------------------------------------------------------------------
# Wrapper
# ----------------------------------------------------------------------------
@jax.jit
def rnn_forward(x, w_ih, w_hh, b, w_c, b_c):
    """x: (B, T, D) batch_first, like the PyTorch module. Returns (B, n_class).

    Weights are pre-transposed for row-major (x @ W) matmuls:
      w_ih (D, 4H), w_hh (H, 4H), b (1, 4H) = b_ih + b_hh,
      w_c (H, C),   b_c (1, C).
    """
    B, T, D = x.shape
    H = w_hh.shape[0]
    C = w_c.shape[1]
    assert D % 128 == 0 and H % 128 == 0, "D and H must be multiples of 128"

    B_pad = _round_up(B, 8)       # sublane-friendly batch
    C_pad = _round_up(C, 128)     # lane-dense classifier output

    # bf16 matmul operands (MXU-native); biases / accumulation stay f32.
    x_bf = x.astype(jnp.bfloat16)
    if B_pad != B:
        x_bf = jnp.pad(x_bf, ((0, B_pad - B), (0, 0), (0, 0)))
    w_ih_bf = w_ih.astype(jnp.bfloat16)
    w_hh_bf = w_hh.astype(jnp.bfloat16)
    w_c_bf = jnp.zeros((H, C_pad), jnp.bfloat16).at[:, :C].set(
        w_c.astype(jnp.bfloat16))
    b_c_pad = jnp.zeros((1, C_pad), jnp.float32).at[:, :C].set(
        b_c.astype(jnp.float32))
    b_f32 = b.astype(jnp.float32)

    Bt, Tc = _pick_tiles(B_pad, T, D, H)

    # Grid-invariant weight operands keep default (double) buffering: at the
    # demo H they are a few hundred KB; single-buffering them only matters at
    # full-size H (see TODO at top of file).
    out_pad = pl.pallas_call(
        lstm_fused_kernel,
        out_shape=jax.ShapeDtypeStruct((B_pad, C_pad), jnp.float32),
        grid_spec=pltpu.PrefetchScalarGridSpec(
            num_scalar_prefetch=0,
            grid=(B_pad // Bt, T // Tc),
            in_specs=[
                pl.BlockSpec((Bt, Tc, D), lambda bi, ti: (bi, ti, 0)),
                pl.BlockSpec((D, 4 * H), lambda bi, ti: (0, 0)),
                pl.BlockSpec((H, 4 * H), lambda bi, ti: (0, 0)),
                pl.BlockSpec((1, 4 * H), lambda bi, ti: (0, 0)),
                pl.BlockSpec((H, C_pad), lambda bi, ti: (0, 0)),
                pl.BlockSpec((1, C_pad), lambda bi, ti: (0, 0)),
            ],
            out_specs=pl.BlockSpec((Bt, C_pad), lambda bi, ti: (bi, 0)),
            scratch_shapes=[
                pltpu.VMEM((Bt, H), jnp.float32),  # h state
                pltpu.VMEM((Bt, H), jnp.float32),  # c state
            ],
        ),
        compiler_params=pltpu.CompilerParams(
            dimension_semantics=("parallel", "arbitrary"),
            # Explicit limit: above v5e's 16 MiB default scoped limit, with
            # headroom under v7x's 64 MiB physical VMEM.
            vmem_limit_bytes=48 * 1024 * 1024),
    )(x_bf, w_ih_bf, w_hh_bf, b_f32, w_c_bf, b_c_pad)

    return out_pad[:B, :C]


# ----------------------------------------------------------------------------
# Pure-JAX reference (f32 math) of the PyTorch LSTM + Linear forward
# ----------------------------------------------------------------------------
def reference_forward(x, w_ih, w_hh, b, w_c, b_c):
    B, T, D = x.shape
    H = w_hh.shape[0]

    def step(carry, x_t):
        h, c = carry
        gates = x_t @ w_ih + h @ w_hh + b[0]
        i = jax.nn.sigmoid(gates[:, 0 * H:1 * H])
        f = jax.nn.sigmoid(gates[:, 1 * H:2 * H])
        g = jnp.tanh(gates[:, 2 * H:3 * H])
        o = jax.nn.sigmoid(gates[:, 3 * H:4 * H])
        c = f * c + i * g
        h = o * jnp.tanh(c)
        return (h, c), None

    h0 = jnp.zeros((B, H), jnp.float32)
    c0 = jnp.zeros((B, H), jnp.float32)
    (h_T, _), _ = jax.lax.scan(step, (h0, c0), jnp.transpose(x, (1, 0, 2)))
    return h_T @ w_c + b_c[0]


if __name__ == "__main__":
    # Small shapes consistent with the module's forward: (batch, seq, in_dim)
    B, T, D, H, C = 2, 8, 128, 128, 7

    key = jax.random.PRNGKey(0)
    keys = jax.random.split(key, 8)
    scale = 1.0 / jnp.sqrt(jnp.float32(H))  # PyTorch default init range

    x = jax.random.normal(keys[0], (B, T, D), jnp.float32)

    # PyTorch parameter shapes: weight_ih (4H, D), weight_hh (4H, H),
    # bias_ih/bias_hh (4H,), classifier weight (C, H), bias (C,).
    w_ih_pt = jax.random.uniform(keys[1], (4 * H, D), jnp.float32, -scale, scale)
    w_hh_pt = jax.random.uniform(keys[2], (4 * H, H), jnp.float32, -scale, scale)
    b_ih = jax.random.uniform(keys[3], (4 * H,), jnp.float32, -scale, scale)
    b_hh = jax.random.uniform(keys[4], (4 * H,), jnp.float32, -scale, scale)
    w_c_pt = jax.random.uniform(keys[5], (C, H), jnp.float32, -scale, scale)
    b_c_pt = jax.random.uniform(keys[6], (C,), jnp.float32, -scale, scale)

    # Pre-transpose for row-major x @ W matmuls in the kernel.
    w_ih = w_ih_pt.T                      # (D, 4H)
    w_hh = w_hh_pt.T                      # (H, 4H)
    b = (b_ih + b_hh)[None, :]            # (1, 4H)
    w_c = w_c_pt.T                        # (H, C)
    b_c = b_c_pt[None, :]                 # (1, C)

    out = rnn_forward(x, w_ih, w_hh, b, w_c, b_c)
    out = jax.block_until_ready(out)

    # Reference uses the same bf16-rounded matmul operands (upcast to f32) so
    # the comparison isolates the kernel; state/activations are f32 in both.
    ref = reference_forward(
        x.astype(jnp.bfloat16).astype(jnp.float32),
        w_ih.astype(jnp.bfloat16).astype(jnp.float32),
        w_hh.astype(jnp.bfloat16).astype(jnp.float32),
        b,
        w_c.astype(jnp.bfloat16).astype(jnp.float32),
        b_c)

    assert out.shape == (B, C)
    assert jnp.allclose(out, ref, atol=2e-2, rtol=2e-2), "mismatch vs reference"

    print("KERNEL_OK")
</pallas_src>

<mosaic_0001>
module attributes {stable_mosaic.version = 11 : i64} {
  func.func @lstm_fused_kernel(%arg0: i32, %arg1: i32, %arg2: memref<8x8x128xbf16, #tpu.memory_space<vmem>>, %arg3: memref<128x512xbf16, #tpu.memory_space<vmem>>, %arg4: memref<128x512xbf16, #tpu.memory_space<vmem>>, %arg5: memref<1x512xf32, #tpu.memory_space<vmem>>, %arg6: memref<128x128xbf16, #tpu.memory_space<vmem>>, %arg7: memref<1x128xf32, #tpu.memory_space<vmem>>, %arg8: memref<8x128xf32, #tpu.memory_space<vmem>>, %arg9: memref<8x128xf32, #tpu.memory_space<vmem>>, %arg10: memref<8x128xf32, #tpu.memory_space<vmem>>) attributes {dimension_semantics = [#tpu.dimension_semantics<parallel>, #tpu.dimension_semantics<arbitrary>], iteration_bounds = array<i64: 1, 1>, scalar_prefetch = 0 : i64, scratch_operands = 2 : i64, tpu.core_type = #tpu.core_type<tc>, window_params = [{transform_indices = @transform_0, window_bounds = array<i64: 8, 8, 128>}, {pipeline_mode = #tpu.pipeline_mode<synchronous>, transform_indices = @transform_1, window_bounds = array<i64: 128, 512>}, {pipeline_mode = #tpu.pipeline_mode<synchronous>, transform_indices = @transform_2, window_bounds = array<i64: 128, 512>}, {pipeline_mode = #tpu.pipeline_mode<synchronous>, transform_indices = @transform_3, window_bounds = array<i64: 1, 512>}, {pipeline_mode = #tpu.pipeline_mode<synchronous>, transform_indices = @transform_4, window_bounds = array<i64: 128, 128>}, {pipeline_mode = #tpu.pipeline_mode<synchronous>, transform_indices = @transform_5, window_bounds = array<i64: 1, 128>}, {transform_indices = @transform_6, window_bounds = array<i64: 8, 128>}]} {
    %c0_i32 = arith.constant 0 : i32
    %0 = arith.cmpi eq, %arg1, %c0_i32 : i32
    %1 = arith.extui %0 : i1 to i32
    %c0_i32_0 = arith.constant 0 : i32
    %2 = arith.cmpi ne, %1, %c0_i32_0 : i32
    scf.if %2 {
      %cst_72 = arith.constant 0.000000e+00 : f32
      %277 = vector.broadcast %cst_72 : f32 to vector<8x128xf32>
      %c0_73 = arith.constant 0 : index
      %c0_74 = arith.constant 0 : index
      %278 = vector.load %arg9[%c0_73, %c0_74] : memref<8x128xf32, #tpu.memory_space<vmem>>, vector<8x128xf32>
      tpu.vector_store %arg9[%c0_73, %c0_74], %277 {strides = array<i32>} : memref<8x128xf32, #tpu.memory_space<vmem>>, vector<8x128xf32>,
      %cst_75 = arith.constant 0.000000e+00 : f32
      %279 = vector.broadcast %cst_75 : f32 to vector<8x128xf32>
      %c0_76 = arith.constant 0 : index
      %c0_77 = arith.constant 0 : index
      %280 = vector.load %arg10[%c0_76, %c0_77] : memref<8x128xf32, #tpu.memory_space<vmem>>, vector<8x128xf32>
      tpu.vector_store %arg10[%c0_76, %c0_77], %279 {strides = array<i32>} : memref<8x128xf32, #tpu.memory_space<vmem>>, vector<8x128xf32>,
    } else {
    }
    %c0 = arith.constant 0 : index
    %c0_1 = arith.constant 0 : index
    %3 = vector.load %arg3[%c0, %c0_1] : memref<128x512xbf16, #tpu.memory_space<vmem>>, vector<128x512xbf16>
    %c0_2 = arith.constant 0 : index
    %c0_3 = arith.constant 0 : index
    %4 = vector.load %arg4[%c0_2, %c0_3] : memref<128x512xbf16, #tpu.memory_space<vmem>>, vector<128x512xbf16>
    %c0_4 = arith.constant 0 : index
    %c0_5 = arith.constant 0 : index
    %5 = vector.load %arg5[%c0_4, %c0_5] : memref<1x512xf32, #tpu.memory_space<vmem>>, vector<1x512xf32>
    %c0_6 = arith.constant 0 : index
    %c0_7 = arith.constant 0 : index
    %6 = vector.load %arg9[%c0_6, %c0_7] : memref<8x128xf32, #tpu.memory_space<vmem>>, vector<8x128xf32>
    %c0_8 = arith.constant 0 : index
    %c0_9 = arith.constant 0 : index
    %7 = vector.load %arg10[%c0_8, %c0_9] : memref<8x128xf32, #tpu.memory_space<vmem>>, vector<8x128xf32>
    %c0_10 = arith.constant 0 : index
    %c0_11 = arith.constant 0 : index
    %c0_12 = arith.constant 0 : index
    %8 = vector.load %arg2[%c0_10, %c0_11, %c0_12] : memref<8x8x128xbf16, #tpu.memory_space<vmem>>, vector<8x1x128xbf16>
    %9 = vector.shape_cast %8 : vector<8x1x128xbf16> to vector<8x128xbf16>
    %cst = arith.constant dense<0.000000e+00> : vector<8x512xf32>
    %10 = tpu.matmul %9, %3, %cst {dimension_numbers = #tpu.dot_dimension_numbers<[1], [0], [0], [1], [0, 0, 1, 1], [], []>} : vector<8x128xbf16>, vector<128x512xbf16>, vector<8x512xf32> -> vector<8x512xf32>
    %11 = vector.broadcast %5 : vector<1x512xf32> to vector<8x512xf32>
    %12 = arith.addf %10, %11 : vector<8x512xf32>
    %13 = arith.truncf %6 : vector<8x128xf32> to vector<8x128xbf16>
    %cst_13 = arith.constant dense<0.000000e+00> : vector<8x512xf32>
    %14 = tpu.matmul %13, %4, %cst_13 {dimension_numbers = #tpu.dot_dimension_numbers<[1], [0], [0], [1], [0, 0, 1, 1], [], []>} : vector<8x128xbf16>, vector<128x512xbf16>, vector<8x512xf32> -> vector<8x512xf32>
    %15 = arith.addf %12, %14 : vector<8x512xf32>
    %16 = vector.extract_strided_slice %15 {offsets = [0, 0], sizes = [8, 128], strides = [1, 1]} : vector<8x512xf32> to vector<8x128xf32>
    %17 = arith.negf %16 : vector<8x128xf32>
    %18 = math.exp %17 : vector<8x128xf32>
    %cst_14 = arith.constant 1.000000e+00 : f32
    %19 = vector.broadcast %cst_14 : f32 to vector<8x128xf32>
    %20 = arith.addf %19, %18 : vector<8x128xf32>
    %21 = arith.divf %19, %20 : vector<8x128xf32>
    %22 = vector.extract_strided_slice %15 {offsets = [0, 128], sizes = [8, 128], strides = [1, 1]} : vector<8x512xf32> to vector<8x128xf32>
    %23 = arith.negf %22 : vector<8x128xf32>
    %24 = math.exp %23 : vector<8x128xf32>
    %cst_15 = arith.constant 1.000000e+00 : f32
    %25 = vector.broadcast %cst_15 : f32 to vector<8x128xf32>
    %26 = arith.addf %25, %24 : vector<8x128xf32>
    %27 = arith.divf %25, %26 : vector<8x128xf32>
    %28 = vector.extract_strided_slice %15 {offsets = [0, 256], sizes = [8, 128], strides = [1, 1]} : vector<8x512xf32> to vector<8x128xf32>
    %29 = math.tanh %28 : vector<8x128xf32>
    %30 = vector.extract_strided_slice %15 {offsets = [0, 384], sizes = [8, 128], strides = [1, 1]} : vector<8x512xf32> to vector<8x128xf32>
    %31 = arith.negf %30 : vector<8x128xf32>
    %32 = math.exp %31 : vector<8x128xf32>
    %cst_16 = arith.constant 1.000000e+00 : f32
    %33 = vector.broadcast %cst_16 : f32 to vector<8x128xf32>
    %34 = arith.addf %33, %32 : vector<8x128xf32>
    %35 = arith.divf %33, %34 : vector<8x128xf32>
    %36 = arith.mulf %27, %7 : vector<8x128xf32>
    %37 = arith.mulf %21, %29 : vector<8x128xf32>
    %38 = arith.addf %36, %37 : vector<8x128xf32>
    %39 = math.tanh %38 : vector<8x128xf32>
    %40 = arith.mulf %35, %39 : vector<8x128xf32>
    %c0_17 = arith.constant 0 : index
    %c1 = arith.constant 1 : index
    %c0_18 = arith.constant 0 : index
    %41 = vector.load %arg2[%c0_17, %c1, %c0_18] : memref<8x8x128xbf16, #tpu.memory_space<vmem>>, vector<8x1x128xbf16>
    %42 = vector.shape_cast %41 : vector<8x1x128xbf16> to vector<8x128xbf16>
    %cst_19 = arith.constant dense<0.000000e+00> : vector<8x512xf32>
    %43 = tpu.matmul %42, %3, %cst_19 {dimension_numbers = #tpu.dot_dimension_numbers<[1], [0], [0], [1], [0, 0, 1, 1], [], []>} : vector<8x128xbf16>, vector<128x512xbf16>, vector<8x512xf32> -> vector<8x512xf32>
    %44 = vector.broadcast %5 : vector<1x512xf32> to vector<8x512xf32>
    %45 = arith.addf %43, %44 : vector<8x512xf32>
    %46 = arith.truncf %40 : vector<8x128xf32> to vector<8x128xbf16>
    %cst_20 = arith.constant dense<0.000000e+00> : vector<8x512xf32>
    %47 = tpu.matmul %46, %4, %cst_20 {dimension_numbers = #tpu.dot_dimension_numbers<[1], [0], [0], [1], [0, 0, 1, 1], [], []>} : vector<8x128xbf16>, vector<128x512xbf16>, vector<8x512xf32> -> vector<8x512xf32>
    %48 = arith.addf %45, %47 : vector<8x512xf32>
    %49 = vector.extract_strided_slice %48 {offsets = [0, 0], sizes = [8, 128], strides = [1, 1]} : vector<8x512xf32> to vector<8x128xf32>
    %50 = arith.negf %49 : vector<8x128xf32>
    %51 = math.exp %50 : vector<8x128xf32>
    %cst_21 = arith.constant 1.000000e+00 : f32
    %52 = vector.broadcast %cst_21 : f32 to vector<8x128xf32>
    %53 = arith.addf %52, %51 : vector<8x128xf32>
    %54 = arith.divf %52, %53 : vector<8x128xf32>
    %55 = vector.extract_strided_slice %48 {offsets = [0, 128], sizes = [8, 128], strides = [1, 1]} : vector<8x512xf32> to vector<8x128xf32>
    %56 = arith.negf %55 : vector<8x128xf32>
    %57 = math.exp %56 : vector<8x128xf32>
    %cst_22 = arith.constant 1.000000e+00 : f32
    %58 = vector.broadcast %cst_22 : f32 to vector<8x128xf32>
    %59 = arith.addf %58, %57 : vector<8x128xf32>
    %60 = arith.divf %58, %59 : vector<8x128xf32>
    %61 = vector.extract_strided_slice %48 {offsets = [0, 256], sizes = [8, 128], strides = [1, 1]} : vector<8x512xf32> to vector<8x128xf32>
    %62 = math.tanh %61 : vector<8x128xf32>
    %63 = vector.extract_strided_slice %48 {offsets = [0, 384], sizes = [8, 128], strides = [1, 1]} : vector<8x512xf32> to vector<8x128xf32>
    %64 = arith.negf %63 : vector<8x128xf32>
    %65 = math.exp %64 : vector<8x128xf32>
    %cst_23 = arith.constant 1.000000e+00 : f32
    %66 = vector.broadcast %cst_23 : f32 to vector<8x128xf32>
    %67 = arith.addf %66, %65 : vector<8x128xf32>
    %68 = arith.divf %66, %67 : vector<8x128xf32>
    %69 = arith.mulf %60, %38 : vector<8x128xf32>
    %70 = arith.mulf %54, %62 : vector<8x128xf32>
    %71 = arith.addf %69, %70 : vector<8x128xf32>
    %72 = math.tanh %71 : vector<8x128xf32>
    %73 = arith.mulf %68, %72 : vector<8x128xf32>
    %c0_24 = arith.constant 0 : index
    %c2 = arith.constant 2 : index
    %c0_25 = arith.constant 0 : index
    %74 = vector.load %arg2[%c0_24, %c2, %c0_25] : memref<8x8x128xbf16, #tpu.memory_space<vmem>>, vector<8x1x128xbf16>
    %75 = vector.shape_cast %74 : vector<8x1x128xbf16> to vector<8x128xbf16>
    %cst_26 = arith.constant dense<0.000000e+00> : vector<8x512xf32>
    %76 = tpu.matmul %75, %3, %cst_26 {dimension_numbers = #tpu.dot_dimension_numbers<[1], [0], [0], [1], [0, 0, 1, 1], [], []>} : vector<8x128xbf16>, vector<128x512xbf16>, vector<8x512xf32> -> vector<8x512xf32>
    %77 = vector.broadcast %5 : vector<1x512xf32> to vector<8x512xf32>
    %78 = arith.addf %76, %77 : vector<8x512xf32>
    %79 = arith.truncf %73 : vector<8x128xf32> to vector<8x128xbf16>
    %cst_27 = arith.constant dense<0.000000e+00> : vector<8x512xf32>
    %80 = tpu.matmul %79, %4, %cst_27 {dimension_numbers = #tpu.dot_dimension_numbers<[1], [0], [0], [1], [0, 0, 1, 1], [], []>} : vector<8x128xbf16>, vector<128x512xbf16>, vector<8x512xf32> -> vector<8x512xf32>
    %81 = arith.addf %78, %80 : vector<8x512xf32>
    %82 = vector.extract_strided_slice %81 {offsets = [0, 0], sizes = [8, 128], strides = [1, 1]} : vector<8x512xf32> to vector<8x128xf32>
    %83 = arith.negf %82 : vector<8x128xf32>
    %84 = math.exp %83 : vector<8x128xf32>
    %cst_28 = arith.constant 1.000000e+00 : f32
    %85 = vector.broadcast %cst_28 : f32 to vector<8x128xf32>
    %86 = arith.addf %85, %84 : vector<8x128xf32>
    %87 = arith.divf %85, %86 : vector<8x128xf32>
    %88 = vector.extract_strided_slice %81 {offsets = [0, 128], sizes = [8, 128], strides = [1, 1]} : vector<8x512xf32> to vector<8x128xf32>
    %89 = arith.negf %88 : vector<8x128xf32>
    %90 = math.exp %89 : vector<8x128xf32>
    %cst_29 = arith.constant 1.000000e+00 : f32
    %91 = vector.broadcast %cst_29 : f32 to vector<8x128xf32>
    %92 = arith.addf %91, %90 : vector<8x128xf32>
    %93 = arith.divf %91, %92 : vector<8x128xf32>
    %94 = vector.extract_strided_slice %81 {offsets = [0, 256], sizes = [8, 128], strides = [1, 1]} : vector<8x512xf32> to vector<8x128xf32>
    %95 = math.tanh %94 : vector<8x128xf32>
    %96 = vector.extract_strided_slice %81 {offsets = [0, 384], sizes = [8, 128], strides = [1, 1]} : vector<8x512xf32> to vector<8x128xf32>
    %97 = arith.negf %96 : vector<8x128xf32>
    %98 = math.exp %97 : vector<8x128xf32>
    %cst_30 = arith.constant 1.000000e+00 : f32
    %99 = vector.broadcast %cst_30 : f32 to vector<8x128xf32>
    %100 = arith.addf %99, %98 : vector<8x128xf32>
    %101 = arith.divf %99, %100 : vector<8x128xf32>
    %102 = arith.mulf %93, %71 : vector<8x128xf32>
    %103 = arith.mulf %87, %95 : vector<8x128xf32>
    %104 = arith.addf %102, %103 : vector<8x128xf32>
    %105 = math.tanh %104 : vector<8x128xf32>
    %106 = arith.mulf %101, %105 : vector<8x128xf32>
    %c0_31 = arith.constant 0 : index
    %c3 = arith.constant 3 : index
    %c0_32 = arith.constant 0 : index
    %107 = vector.load %arg2[%c0_31, %c3, %c0_32] : memref<8x8x128xbf16, #tpu.memory_space<vmem>>, vector<8x1x128xbf16>
    %108 = vector.shape_cast %107 : vector<8x1x128xbf16> to vector<8x128xbf16>
    %cst_33 = arith.constant dense<0.000000e+00> : vector<8x512xf32>
    %109 = tpu.matmul %108, %3, %cst_33 {dimension_numbers = #tpu.dot_dimension_numbers<[1], [0], [0], [1], [0, 0, 1, 1], [], []>} : vector<8x128xbf16>, vector<128x512xbf16>, vector<8x512xf32> -> vector<8x512xf32>
    %110 = vector.broadcast %5 : vector<1x512xf32> to vector<8x512xf32>
    %111 = arith.addf %109, %110 : vector<8x512xf32>
    %112 = arith.truncf %106 : vector<8x128xf32> to vector<8x128xbf16>
    %cst_34 = arith.constant dense<0.000000e+00> : vector<8x512xf32>
    %113 = tpu.matmul %112, %4, %cst_34 {dimension_numbers = #tpu.dot_dimension_numbers<[1], [0], [0], [1], [0, 0, 1, 1], [], []>} : vector<8x128xbf16>, vector<128x512xbf16>, vector<8x512xf32> -> vector<8x512xf32>
    %114 = arith.addf %111, %113 : vector<8x512xf32>
    %115 = vector.extract_strided_slice %114 {offsets = [0, 0], sizes = [8, 128], strides = [1, 1]} : vector<8x512xf32> to vector<8x128xf32>
    %116 = arith.negf %115 : vector<8x128xf32>
    %117 = math.exp %116 : vector<8x128xf32>
    %cst_35 = arith.constant 1.000000e+00 : f32
    %118 = vector.broadcast %cst_35 : f32 to vector<8x128xf32>
    %119 = arith.addf %118, %117 : vector<8x128xf32>
    %120 = arith.divf %118, %119 : vector<8x128xf32>
    %121 = vector.extract_strided_slice %114 {offsets = [0, 128], sizes = [8, 128], strides = [1, 1]} : vector<8x512xf32> to vector<8x128xf32>
    %122 = arith.negf %121 : vector<8x128xf32>
    %123 = math.exp %122 : vector<8x128xf32>
    %cst_36 = arith.constant 1.000000e+00 : f32
    %124 = vector.broadcast %cst_36 : f32 to vector<8x128xf32>
    %125 = arith.addf %124, %123 : vector<8x128xf32>
    %126 = arith.divf %124, %125 : vector<8x128xf32>
    %127 = vector.extract_strided_slice %114 {offsets = [0, 256], sizes = [8, 128], strides = [1, 1]} : vector<8x512xf32> to vector<8x128xf32>
    %128 = math.tanh %127 : vector<8x128xf32>
    %129 = vector.extract_strided_slice %114 {offsets = [0, 384], sizes = [8, 128], strides = [1, 1]} : vector<8x512xf32> to vector<8x128xf32>
    %130 = arith.negf %129 : vector<8x128xf32>
    %131 = math.exp %130 : vector<8x128xf32>
    %cst_37 = arith.constant 1.000000e+00 : f32
    %132 = vector.broadcast %cst_37 : f32 to vector<8x128xf32>
    %133 = arith.addf %132, %131 : vector<8x128xf32>
    %134 = arith.divf %132, %133 : vector<8x128xf32>
    %135 = arith.mulf %126, %104 : vector<8x128xf32>
    %136 = arith.mulf %120, %128 : vector<8x128xf32>
    %137 = arith.addf %135, %136 : vector<8x128xf32>
    %138 = math.tanh %137 : vector<8x128xf32>
    %139 = arith.mulf %134, %138 : vector<8x128xf32>
    %c0_38 = arith.constant 0 : index
    %c4 = arith.constant 4 : index
    %c0_39 = arith.constant 0 : index
    %140 = vector.load %arg2[%c0_38, %c4, %c0_39] : memref<8x8x128xbf16, #tpu.memory_space<vmem>>, vector<8x1x128xbf16>
    %141 = vector.shape_cast %140 : vector<8x1x128xbf16> to vector<8x128xbf16>
    %cst_40 = arith.constant dense<0.000000e+00> : vector<8x512xf32>
    %142 = tpu.matmul %141, %3, %cst_40 {dimension_numbers = #tpu.dot_dimension_numbers<[1], [0], [0], [1], [0, 0, 1, 1], [], []>} : vector<8x128xbf16>, vector<128x512xbf16>, vector<8x512xf32> -> vector<8x512xf32>
    %143 = vector.broadcast %5 : vector<1x512xf32> to vector<8x512xf32>
    %144 = arith.addf %142, %143 : vector<8x512xf32>
    %145 = arith.truncf %139 : vector<8x128xf32> to vector<8x128xbf16>
    %cst_41 = arith.constant dense<0.000000e+00> : vector<8x512xf32>
    %146 = tpu.matmul %145, %4, %cst_41 {dimension_numbers = #tpu.dot_dimension_numbers<[1], [0], [0], [1], [0, 0, 1, 1], [], []>} : vector<8x128xbf16>, vector<128x512xbf16>, vector<8x512xf32> -> vector<8x512xf32>
    %147 = arith.addf %144, %146 : vector<8x512xf32>
    %148 = vector.extract_strided_slice %147 {offsets = [0, 0], sizes = [8, 128], strides = [1, 1]} : vector<8x512xf32> to vector<8x128xf32>
    %149 = arith.negf %148 : vector<8x128xf32>
    %150 = math.exp %149 : vector<8x128xf32>
    %cst_42 = arith.constant 1.000000e+00 : f32
    %151 = vector.broadcast %cst_42 : f32 to vector<8x128xf32>
    %152 = arith.addf %151, %150 : vector<8x128xf32>
    %153 = arith.divf %151, %152 : vector<8x128xf32>
    %154 = vector.extract_strided_slice %147 {offsets = [0, 128], sizes = [8, 128], strides = [1, 1]} : vector<8x512xf32> to vector<8x128xf32>
    %155 = arith.negf %154 : vector<8x128xf32>
    %156 = math.exp %155 : vector<8x128xf32>
    %cst_43 = arith.constant 1.000000e+00 : f32
    %157 = vector.broadcast %cst_43 : f32 to vector<8x128xf32>
    %158 = arith.addf %157, %156 : vector<8x128xf32>
    %159 = arith.divf %157, %158 : vector<8x128xf32>
    %160 = vector.extract_strided_slice %147 {offsets = [0, 256], sizes = [8, 128], strides = [1, 1]} : vector<8x512xf32> to vector<8x128xf32>
    %161 = math.tanh %160 : vector<8x128xf32>
    %162 = vector.extract_strided_slice %147 {offsets = [0, 384], sizes = [8, 128], strides = [1, 1]} : vector<8x512xf32> to vector<8x128xf32>
    %163 = arith.negf %162 : vector<8x128xf32>
    %164 = math.exp %163 : vector<8x128xf32>
    %cst_44 = arith.constant 1.000000e+00 : f32
    %165 = vector.broadcast %cst_44 : f32 to vector<8x128xf32>
    %166 = arith.addf %165, %164 : vector<8x128xf32>
    %167 = arith.divf %165, %166 : vector<8x128xf32>
    %168 = arith.mulf %159, %137 : vector<8x128xf32>
    %169 = arith.mulf %153, %161 : vector<8x128xf32>
    %170 = arith.addf %168, %169 : vector<8x128xf32>
    %171 = math.tanh %170 : vector<8x128xf32>
    %172 = arith.mulf %167, %171 : vector<8x128xf32>
    %c0_45 = arith.constant 0 : index
    %c5 = arith.constant 5 : index
    %c0_46 = arith.constant 0 : index
    %173 = vector.load %arg2[%c0_45, %c5, %c0_46] : memref<8x8x128xbf16, #tpu.memory_space<vmem>>, vector<8x1x128xbf16>
    %174 = vector.shape_cast %173 : vector<8x1x128xbf16> to vector<8x128xbf16>
    %cst_47 = arith.constant dense<0.000000e+00> : vector<8x512xf32>
    %175 = tpu.matmul %174, %3, %cst_47 {dimension_numbers = #tpu.dot_dimension_numbers<[1], [0], [0], [1], [0, 0, 1, 1], [], []>} : vector<8x128xbf16>, vector<128x512xbf16>, vector<8x512xf32> -> vector<8x512xf32>
    %176 = vector.broadcast %5 : vector<1x512xf32> to vector<8x512xf32>
    %177 = arith.addf %175, %176 : vector<8x512xf32>
    %178 = arith.truncf %172 : vector<8x128xf32> to vector<8x128xbf16>
    %cst_48 = arith.constant dense<0.000000e+00> : vector<8x512xf32>
    %179 = tpu.matmul %178, %4, %cst_48 {dimension_numbers = #tpu.dot_dimension_numbers<[1], [0], [0], [1], [0, 0, 1, 1], [], []>} : vector<8x128xbf16>, vector<128x512xbf16>, vector<8x512xf32> -> vector<8x512xf32>
    %180 = arith.addf %177, %179 : vector<8x512xf32>
    %181 = vector.extract_strided_slice %180 {offsets = [0, 0], sizes = [8, 128], strides = [1, 1]} : vector<8x512xf32> to vector<8x128xf32>
    %182 = arith.negf %181 : vector<8x128xf32>
    %183 = math.exp %182 : vector<8x128xf32>
    %cst_49 = arith.constant 1.000000e+00 : f32
    %184 = vector.broadcast %cst_49 : f32 to vector<8x128xf32>
    %185 = arith.addf %184, %183 : vector<8x128xf32>
    %186 = arith.divf %184, %185 : vector<8x128xf32>
    %187 = vector.extract_strided_slice %180 {offsets = [0, 128], sizes = [8, 128], strides = [1, 1]} : vector<8x512xf32> to vector<8x128xf32>
    %188 = arith.negf %187 : vector<8x128xf32>
    %189 = math.exp %188 : vector<8x128xf32>
    %cst_50 = arith.constant 1.000000e+00 : f32
    %190 = vector.broadcast %cst_50 : f32 to vector<8x128xf32>
    %191 = arith.addf %190, %189 : vector<8x128xf32>
    %192 = arith.divf %190, %191 : vector<8x128xf32>
    %193 = vector.extract_strided_slice %180 {offsets = [0, 256], sizes = [8, 128], strides = [1, 1]} : vector<8x512xf32> to vector<8x128xf32>
    %194 = math.tanh %193 : vector<8x128xf32>
    %195 = vector.extract_strided_slice %180 {offsets = [0, 384], sizes = [8, 128], strides = [1, 1]} : vector<8x512xf32> to vector<8x128xf32>
    %196 = arith.negf %195 : vector<8x128xf32>
    %197 = math.exp %196 : vector<8x128xf32>
    %cst_51 = arith.constant 1.000000e+00 : f32
    %198 = vector.broadcast %cst_51 : f32 to vector<8x128xf32>
    %199 = arith.addf %198, %197 : vector<8x128xf32>
    %200 = arith.divf %198, %199 : vector<8x128xf32>
    %201 = arith.mulf %192, %170 : vector<8x128xf32>
    %202 = arith.mulf %186, %194 : vector<8x128xf32>
    %203 = arith.addf %201, %202 : vector<8x128xf32>
    %204 = math.tanh %203 : vector<8x128xf32>
    %205 = arith.mulf %200, %204 : vector<8x128xf32>
    %c0_52 = arith.constant 0 : index
    %c6 = arith.constant 6 : index
    %c0_53 = arith.constant 0 : index
    %206 = vector.load %arg2[%c0_52, %c6, %c0_53] : memref<8x8x128xbf16, #tpu.memory_space<vmem>>, vector<8x1x128xbf16>
    %207 = vector.shape_cast %206 : vector<8x1x128xbf16> to vector<8x128xbf16>
    %cst_54 = arith.constant dense<0.000000e+00> : vector<8x512xf32>
    %208 = tpu.matmul %207, %3, %cst_54 {dimension_numbers = #tpu.dot_dimension_numbers<[1], [0], [0], [1], [0, 0, 1, 1], [], []>} : vector<8x128xbf16>, vector<128x512xbf16>, vector<8x512xf32> -> vector<8x512xf32>
    %209 = vector.broadcast %5 : vector<1x512xf32> to vector<8x512xf32>
    %210 = arith.addf %208, %209 : vector<8x512xf32>
    %211 = arith.truncf %205 : vector<8x128xf32> to vector<8x128xbf16>
    %cst_55 = arith.constant dense<0.000000e+00> : vector<8x512xf32>
    %212 = tpu.matmul %211, %4, %cst_55 {dimension_numbers = #tpu.dot_dimension_numbers<[1], [0], [0], [1], [0, 0, 1, 1], [], []>} : vector<8x128xbf16>, vector<128x512xbf16>, vector<8x512xf32> -> vector<8x512xf32>
    %213 = arith.addf %210, %212 : vector<8x512xf32>
    %214 = vector.extract_strided_slice %213 {offsets = [0, 0], sizes = [8, 128], strides = [1, 1]} : vector<8x512xf32> to vector<8x128xf32>
    %215 = arith.negf %214 : vector<8x128xf32>
    %216 = math.exp %215 : vector<8x128xf32>
    %cst_56 = arith.constant 1.000000e+00 : f32
    %217 = vector.broadcast %cst_56 : f32 to vector<8x128xf32>
    %218 = arith.addf %217, %216 : vector<8x128xf32>
    %219 = arith.divf %217, %218 : vector<8x128xf32>
    %220 = vector.extract_strided_slice %213 {offsets = [0, 128], sizes = [8, 128], strides = [1, 1]} : vector<8x512xf32> to vector<8x128xf32>
    %221 = arith.negf %220 : vector<8x128xf32>
    %222 = math.exp %221 : vector<8x128xf32>
    %cst_57 = arith.constant 1.000000e+00 : f32
    %223 = vector.broadcast %cst_57 : f32 to vector<8x128xf32>
    %224 = arith.addf %223, %222 : vector<8x128xf32>
    %225 = arith.divf %223, %224 : vector<8x128xf32>
    %226 = vector.extract_strided_slice %213 {offsets = [0, 256], sizes = [8, 128], strides = [1, 1]} : vector<8x512xf32> to vector<8x128xf32>
    %227 = math.tanh %226 : vector<8x128xf32>
    %228 = vector.extract_strided_slice %213 {offsets = [0, 384], sizes = [8, 128], strides = [1, 1]} : vector<8x512xf32> to vector<8x128xf32>
    %229 = arith.negf %228 : vector<8x128xf32>
    %230 = math.exp %229 : vector<8x128xf32>
    %cst_58 = arith.constant 1.000000e+00 : f32
    %231 = vector.broadcast %cst_58 : f32 to vector<8x128xf32>
    %232 = arith.addf %231, %230 : vector<8x128xf32>
    %233 = arith.divf %231, %232 : vector<8x128xf32>
    %234 = arith.mulf %225, %203 : vector<8x128xf32>
    %235 = arith.mulf %219, %227 : vector<8x128xf32>
    %236 = arith.addf %234, %235 : vector<8x128xf32>
    %237 = math.tanh %236 : vector<8x128xf32>
    %238 = arith.mulf %233, %237 : vector<8x128xf32>
    %c0_59 = arith.constant 0 : index
    %c7 = arith.constant 7 : index
    %c0_60 = arith.constant 0 : index
    %239 = vector.load %arg2[%c0_59, %c7, %c0_60] : memref<8x8x128xbf16, #tpu.memory_space<vmem>>, vector<8x1x128xbf16>
    %240 = vector.shape_cast %239 : vector<8x1x128xbf16> to vector<8x128xbf16>
    %cst_61 = arith.constant dense<0.000000e+00> : vector<8x512xf32>
    %241 = tpu.matmul %240, %3, %cst_61 {dimension_numbers = #tpu.dot_dimension_numbers<[1], [0], [0], [1], [0, 0, 1, 1], [], []>} : vector<8x128xbf16>, vector<128x512xbf16>, vector<8x512xf32> -> vector<8x512xf32>
    %242 = vector.broadcast %5 : vector<1x512xf32> to vector<8x512xf32>
    %243 = arith.addf %241, %242 : vector<8x512xf32>
    %244 = arith.truncf %238 : vector<8x128xf32> to vector<8x128xbf16>
    %cst_62 = arith.constant dense<0.000000e+00> : vector<8x512xf32>
    %245 = tpu.matmul %244, %4, %cst_62 {dimension_numbers = #tpu.dot_dimension_numbers<[1], [0], [0], [1], [0, 0, 1, 1], [], []>} : vector<8x128xbf16>, vector<128x512xbf16>, vector<8x512xf32> -> vector<8x512xf32>
    %246 = arith.addf %243, %245 : vector<8x512xf32>
    %247 = vector.extract_strided_slice %246 {offsets = [0, 0], sizes = [8, 128], strides = [1, 1]} : vector<8x512xf32> to vector<8x128xf32>
    %248 = arith.negf %247 : vector<8x128xf32>
    %249 = math.exp %248 : vector<8x128xf32>
    %cst_63 = arith.constant 1.000000e+00 : f32
    %250 = vector.broadcast %cst_63 : f32 to vector<8x128xf32>
    %251 = arith.addf %250, %249 : vector<8x128xf32>
    %252 = arith.divf %250, %251 : vector<8x128xf32>
    %253 = vector.extract_strided_slice %246 {offsets = [0, 128], sizes = [8, 128], strides = [1, 1]} : vector<8x512xf32> to vector<8x128xf32>
    %254 = arith.negf %253 : vector<8x128xf32>
    %255 = math.exp %254 : vector<8x128xf32>
    %cst_64 = arith.constant 1.000000e+00 : f32
    %256 = vector.broadcast %cst_64 : f32 to vector<8x128xf32>
    %257 = arith.addf %256, %255 : vector<8x128xf32>
    %258 = arith.divf %256, %257 : vector<8x128xf32>
    %259 = vector.extract_strided_slice %246 {offsets = [0, 256], sizes = [8, 128], strides = [1, 1]} : vector<8x512xf32> to vector<8x128xf32>
    %260 = math.tanh %259 : vector<8x128xf32>
    %261 = vector.extract_strided_slice %246 {offsets = [0, 384], sizes = [8, 128], strides = [1, 1]} : vector<8x512xf32> to vector<8x128xf32>
    %262 = arith.negf %261 : vector<8x128xf32>
    %263 = math.exp %262 : vector<8x128xf32>
    %cst_65 = arith.constant 1.000000e+00 : f32
    %264 = vector.broadcast %cst_65 : f32 to vector<8x128xf32>
    %265 = arith.addf %264, %263 : vector<8x128xf32>
    %266 = arith.divf %264, %265 : vector<8x128xf32>
    %267 = arith.mulf %258, %236 : vector<8x128xf32>
    %268 = arith.mulf %252, %260 : vector<8x128xf32>
    %269 = arith.addf %267, %268 : vector<8x128xf32>
    %270 = math.tanh %269 : vector<8x128xf32>
    %271 = arith.mulf %266, %270 : vector<8x128xf32>
    %c0_66 = arith.constant 0 : index
    %c0_67 = arith.constant 0 : index
    %272 = vector.load %arg9[%c0_66, %c0_67] : memref<8x128xf32, #tpu.memory_space<vmem>>, vector<8x128xf32>
    tpu.vector_store %arg9[%c0_66, %c0_67], %271 {strides = array<i32>} : memref<8x128xf32, #tpu.memory_space<vmem>>, vector<8x128xf32>,
    %c0_68 = arith.constant 0 : index
    %c0_69 = arith.constant 0 : index
    %273 = vector.load %arg10[%c0_68, %c0_69] : memref<8x128xf32, #tpu.memory_space<vmem>>, vector<8x128xf32>
    tpu.vector_store %arg10[%c0_68, %c0_69], %269 {strides = array<i32>} : memref<8x128xf32, #tpu.memory_space<vmem>>, vector<8x128xf32>,
    %c0_i32_70 = arith.constant 0 : i32
    %274 = arith.cmpi eq, %arg1, %c0_i32_70 : i32
    %275 = arith.extui %274 : i1 to i32
    %c0_i32_71 = arith.constant 0 : i32
    %276 = arith.cmpi ne, %275, %c0_i32_71 : i32
    scf.if %276 {
      %277 = arith.truncf %271 : vector<8x128xf32> to vector<8x128xbf16>
      %c0_72 = arith.constant 0 : index
      %c0_73 = arith.constant 0 : index
      %278 = vector.load %arg6[%c0_72, %c0_73] : memref<128x128xbf16, #tpu.memory_space<vmem>>, vector<128x128xbf16>
      %cst_74 = arith.constant dense<0.000000e+00> : vector<8x128xf32>
      %279 = tpu.matmul %277, %278, %cst_74 {dimension_numbers = #tpu.dot_dimension_numbers<[1], [0], [0], [1], [0, 0, 1, 1], [], []>} : vector<8x128xbf16>, vector<128x128xbf16>, vector<8x128xf32> -> vector<8x128xf32>
      %c0_75 = arith.constant 0 : index
      %c0_76 = arith.constant 0 : index
      %280 = vector.load %arg7[%c0_75, %c0_76] : memref<1x128xf32, #tpu.memory_space<vmem>>, vector<1x128xf32>
      %281 = vector.broadcast %280 : vector<1x128xf32> to vector<8x128xf32>
      %282 = arith.addf %279, %281 : vector<8x128xf32>
      %c0_77 = arith.constant 0 : index
      %c0_78 = arith.constant 0 : index
      %283 = vector.load %arg8[%c0_77, %c0_78] : memref<8x128xf32, #tpu.memory_space<vmem>>, vector<8x128xf32>
      tpu.vector_store %arg8[%c0_77, %c0_78], %282 {strides = array<i32>} : memref<8x128xf32, #tpu.memory_space<vmem>>, vector<8x128xf32>,
    } else {
    }
    return
  }
  func.func @transform_0(%arg0: i32, %arg1: i32) -> (i32, i32, i32) {
    %c0_i32 = arith.constant 0 : i32
    %c0_i32_0 = arith.constant 0 : i32
    return %arg0, %arg1, %c0_i32 : i32, i32, i32
  }
  func.func @transform_1(%arg0: i32, %arg1: i32) -> (i32, i32) {
    %c0_i32 = arith.constant 0 : i32
    %c0_i32_0 = arith.constant 0 : i32
    %c0_i32_1 = arith.constant 0 : i32
    return %c0_i32, %c0_i32_0 : i32, i32
  }
  func.func @transform_2(%arg0: i32, %arg1: i32) -> (i32, i32) {
    %c0_i32 = arith.constant 0 : i32
    %c0_i32_0 = arith.constant 0 : i32
    %c0_i32_1 = arith.constant 0 : i32
    return %c0_i32, %c0_i32_0 : i32, i32
  }
  func.func @transform_3(%arg0: i32, %arg1: i32) -> (i32, i32) {
    %c0_i32 = arith.constant 0 : i32
    %c0_i32_0 = arith.constant 0 : i32
    %c0_i32_1 = arith.constant 0 : i32
    return %c0_i32, %c0_i32_0 : i32, i32
  }
  func.func @transform_4(%arg0: i32, %arg1: i32) -> (i32, i32) {
    %c0_i32 = arith.constant 0 : i32
    %c0_i32_0 = arith.constant 0 : i32
    %c0_i32_1 = arith.constant 0 : i32
    return %c0_i32, %c0_i32_0 : i32, i32
  }
  func.func @transform_5(%arg0: i32, %arg1: i32) -> (i32, i32) {
    %c0_i32 = arith.constant 0 : i32
    %c0_i32_0 = arith.constant 0 : i32
    %c0_i32_1 = arith.constant 0 : i32
    return %c0_i32, %c0_i32_0 : i32, i32
  }
  func.func @transform_6(%arg0: i32, %arg1: i32) -> (i32, i32) {
    %c0_i32 = arith.constant 0 : i32
    %c0_i32_0 = arith.constant 0 : i32
    return %arg0, %c0_i32 : i32, i32
  }
}

</mosaic_0001>

<llo_original>
// kernel: rnn_forward.1
$region0: #{rnn_forward.1}
  #allocation0 [shape = 'u32[]', space=smem, size = 0x4, offset = 0x4, fixed_abs, tag = 'smem constant byte address 0x4 - core index']
  #allocation1 [shape = 'u32[72,128]{1,0:T(1,128)}', space=vmem, size = 0x9000, scoped, tag = 'internal scratch']
  #allocation2 [shape = 'f32[8,128]{1,0:T(8,128)}', space=vmem, size = 0x1000, scoped, tag = 'scratch operand']
  #allocation3 [shape = 'f32[8,128]{1,0:T(8,128)}', space=vmem, size = 0x1000, scoped, tag = 'scratch operand']
  %s0 = inlined_call_operand.vmem [shape: bf16[8,8,128], index: 0, kind: input, shape index: {}]
  %s1 = inlined_call_operand.vmem [shape: bf16[128,512], index: 1, kind: input, shape index: {}]
  %s2 = inlined_call_operand.vmem [shape: bf16[128,512], index: 2, kind: input, shape index: {}]
  %s3 = inlined_call_operand.vmem [shape: f32[1,512], index: 3, kind: input, shape index: {}]
  %s4 = inlined_call_operand.vmem [shape: bf16[128,128], index: 4, kind: input, shape index: {}]
  %s5 = inlined_call_operand.vmem [shape: f32[1,128], index: 5, kind: input, shape index: {}]
  %s6 = inlined_call_operand.vmem [shape: f32[8,128], index: 6, kind: output, shape index: {}]
  %s7 = sld [smem:[#allocation0]]
  $region42: #{rnn_forward.1} parent=0
    _
  %s9 = ssub.s32 1, %s7
  %s10 = scalar_select 0, %s9, %s7
  // Predicated region
  $region2: #{rnn_forward.1} parent=0 // pred_check
    _
  $region3: #{rnn_forward.1} parent=0 // pred_check_branch
    %12 = sbr.rel (0) target = $region5
  $region4: #{rnn_forward.1} parent=0 // pred_region
    _
  $region5: #{rnn_forward.1} parent=0 // pred_fallthru
    _
  // Predicated region
  $region6: #{rnn_forward.1} parent=0 // pred_check
    _
  $region7: #{rnn_forward.1} parent=0 // pred_check_branch
    %14 = sbr.rel (0) target = $region9
  $region8: #{rnn_forward.1} parent=0 // pred_region
    _
  $region9: #{rnn_forward.1} parent=0 // pred_fallthru
    _
  // Predicated region
  $region10: #{rnn_forward.1} parent=0 // pred_check
    _
  $region11: #{rnn_forward.1} parent=0 // pred_check_branch
    %16 = sbr.rel (0) target = $region13
  $region12: #{rnn_forward.1} parent=0 // pred_region
    _
  $region13: #{rnn_forward.1} parent=0 // pred_fallthru
    _
  // Predicated region
  $region14: #{rnn_forward.1} parent=0 // pred_check
    _
  $region15: #{rnn_forward.1} parent=0 // pred_check_branch
    %18 = sbr.rel (0) target = $region17
  $region16: #{rnn_forward.1} parent=0 // pred_region
    _
  $region17: #{rnn_forward.1} parent=0 // pred_fallthru
    _
  // Predicated region
  $region18: #{rnn_forward.1} parent=0 // pred_check
    _
  $region19: #{rnn_forward.1} parent=0 // pred_check_branch
    %20 = sbr.rel (0) target = $region21
  $region20: #{rnn_forward.1} parent=0 // pred_region
    _
  $region21: #{rnn_forward.1} parent=0 // pred_fallthru
    _
  // Predicated region
  $region22: #{rnn_forward.1} parent=0 // pred_check
    _
  $region23: #{rnn_forward.1} parent=0 // pred_check_branch
    %22 = sbr.rel (0) target = $region25
  $region24: #{rnn_forward.1} parent=0 // pred_region
    _
  $region25: #{rnn_forward.1} parent=0 // pred_fallthru
    _
  %p23 = scmp.eq.s32.totalorder 0, 0
  // Predicated region
  $region26: #{rnn_forward.1} parent=0 // pred_check
    %p24 = pneg %p23
  $region27: #{rnn_forward.1} parent=0 // pred_check_branch
    %26 = sbr.rel (%p24) target = $region29
  $region28: #{rnn_forward.1} parent=0 // pred_region
    %27 = vst [vmem:[#allocation2] sm:$0xff] 0.0
    %28 = vst [vmem:[#allocation3] sm:$0xff] 0.0
  $region29: #{rnn_forward.1} parent=0 // pred_fallthru
    _
  %v29 = vld [vmem:[%s1] sm:$0xff]
  %v30 = vld [vmem:[%s1 + $0x8] sm:$0xff]
  %v31 = vld [vmem:[%s1 + $0x10] sm:$0xff]
  %v32 = vld [vmem:[%s1 + $0x18] sm:$0xff]
  %v33 = vld [vmem:[%s1 + $0x20] sm:$0xff]
  %v34 = vld [vmem:[%s1 + $0x28] sm:$0xff]
  %v35 = vld [vmem:[%s1 + $0x30] sm:$0xff]
  %v36 = vld [vmem:[%s1 + $0x38] sm:$0xff]
  %v37 = vld [vmem:[%s1 + $0x40] sm:$0xff]
  %v38 = vld [vmem:[%s1 + $0x48] sm:$0xff]
  %v39 = vld [vmem:[%s1 + $0x50] sm:$0xff]
  %v40 = vld [vmem:[%s1 + $0x58] sm:$0xff]
  %v41 = vld [vmem:[%s1 + $0x60] sm:$0xff]
  %v42 = vld [vmem:[%s1 + $0x68] sm:$0xff]
  %v43 = vld [vmem:[%s1 + $0x70] sm:$0xff]
  %v44 = vld [vmem:[%s1 + $0x78] sm:$0xff]
  %v45 = vld [vmem:[%s1 + $0x80] sm:$0xff]
  %v46 = vld [vmem:[%s1 + $0x88] sm:$0xff]
  %v47 = vld [vmem:[%s1 + $0x90] sm:$0xff]
  %v48 = vld [vmem:[%s1 + $0x98] sm:$0xff]
  %v49 = vld [vmem:[%s1 + $0xa0] sm:$0xff]
  %v50 = vld [vmem:[%s1 + $0xa8] sm:$0xff]
  %v51 = vld [vmem:[%s1 + $0xb0] sm:$0xff]
  %v52 = vld [vmem:[%s1 + $0xb8] sm:$0xff]
  %v53 = vld [vmem:[%s1 + $0xc0] sm:$0xff]
  %v54 = vld [vmem:[%s1 + $0xc8] sm:$0xff]
  %v55 = vld [vmem:[%s1 + $0xd0] sm:$0xff]
  %v56 = vld [vmem:[%s1 + $0xd8] sm:$0xff]
  %v57 = vld [vmem:[%s1 + $0xe0] sm:$0xff]
  %v58 = vld [vmem:[%s1 + $0xe8] sm:$0xff]
  %v59 = vld [vmem:[%s1 + $0xf0] sm:$0xff]
  %v60 = vld [vmem:[%s1 + $0xf8] sm:$0xff]
  %v61 = vld [vmem:[%s2] sm:$0xff]
  %v62 = vld [vmem:[%s2 + $0x8] sm:$0xff]
  %v63 = vld [vmem:[%s2 + $0x10] sm:$0xff]
  %v64 = vld [vmem:[%s2 + $0x18] sm:$0xff]
  %v65 = vld [vmem:[%s2 + $0x20] sm:$0xff]
  %v66 = vld [vmem:[%s2 + $0x28] sm:$0xff]
  %v67 = vld [vmem:[%s2 + $0x30] sm:$0xff]
  %v68 = vld [vmem:[%s2 + $0x38] sm:$0xff]
  %v69 = vld [vmem:[%s2 + $0x40] sm:$0xff]
  %v70 = vld [vmem:[%s2 + $0x48] sm:$0xff]
  %v71 = vld [vmem:[%s2 + $0x50] sm:$0xff]
  %v72 = vld [vmem:[%s2 + $0x58] sm:$0xff]
  %v73 = vld [vmem:[%s2 + $0x60] sm:$0xff]
  %v74 = vld [vmem:[%s2 + $0x68] sm:$0xff]
  %v75 = vld [vmem:[%s2 + $0x70] sm:$0xff]
  %v76 = vld [vmem:[%s2 + $0x78] sm:$0xff]
  %v77 = vld [vmem:[%s2 + $0x80] sm:$0xff]
  %v78 = vld [vmem:[%s2 + $0x88] sm:$0xff]
  %v79 = vld [vmem:[%s2 + $0x90] sm:$0xff]
  %v80 = vld [vmem:[%s2 + $0x98] sm:$0xff]
  %v81 = vld [vmem:[%s2 + $0xa0] sm:$0xff]
  %v82 = vld [vmem:[%s2 + $0xa8] sm:$0xff]
  %v83 = vld [vmem:[%s2 + $0xb0] sm:$0xff]
  %v84 = vld [vmem:[%s2 + $0xb8] sm:$0xff]
  %v85 = vld [vmem:[%s2 + $0xc0] sm:$0xff]
  %v86 = vld [vmem:[%s2 + $0xc8] sm:$0xff]
  %v87 = vld [vmem:[%s2 + $0xd0] sm:$0xff]
  %v88 = vld [vmem:[%s2 + $0xd8] sm:$0xff]
  %v89 = vld [vmem:[%s2 + $0xe0] sm:$0xff]
  %v90 = vld [vmem:[%s2 + $0xe8] sm:$0xff]
  %v91 = vld [vmem:[%s2 + $0xf0] sm:$0xff]
  %v92 = vld [vmem:[%s2 + $0xf8] sm:$0xff]
  %v93 = vld [vmem:[%s3] sm:$0xf]
  %v94 = vld [vmem:[#allocation2] sm:$0xff]
  %v95 = vld [vmem:[#allocation3] sm:$0xff]
  %v96 = vld [vmem:[%s0] sm:$0x1]
  %v97 = vld [vmem:[%s0 + $0x4] sm:$0x1]
  %v98 = vld [vmem:[%s0 + $0x8] sm:$0x1]
  %v99 = vld [vmem:[%s0 + $0xc] sm:$0x1]
  %v100 = vld [vmem:[%s0 + $0x10] sm:$0x1]
  %v101 = vld [vmem:[%s0 + $0x14] sm:$0x1]
  %v102 = vld [vmem:[%s0 + $0x18] sm:$0x1]
  %v103 = vld [vmem:[%s0 + $0x1c] sm:$0x1]
  %v105 = vperm.slane %v93, 0
  %v106 = vperm.slane %v93, 1
  %v107 = vperm.slane %v93, 2
  %v108 = vperm.slane %v93, 3
  %v121 = vunpack.c.l.b16 %v96
  %v122 = vunpack.c.l.b16 %v97
  %v123 = vunpack.c.l.b16 %v98
  %v124 = vunpack.c.l.b16 %v99
  %v125 = vunpack.c.l.b16 %v100
  %v126 = vunpack.c.l.b16 %v101
  %v127 = vunpack.c.l.b16 %v102
  %v128 = vunpack.c.l.b16 %v103
  %v129 = vpack.c.b16 %v121, %v121
  %v130 = vpack.c.b16 %v122, %v122
  %v131 = vpack.c.b16 %v123, %v123
  %v132 = vpack.c.b16 %v124, %v124
  %v133 = vpack.c.b16 %v125, %v125
  %v134 = vpack.c.b16 %v126, %v126
  %v135 = vpack.c.b16 %v127, %v127
  %v136 = vpack.c.b16 %v128, %v128
  %v137 = vunpack.c.l.b16 %v129
  %v138 = vunpack.c.l.b16 %v130
  %v139 = vunpack.c.l.b16 %v131
  %v140 = vunpack.c.l.b16 %v132
  %v141 = vunpack.c.l.b16 %v133
  %v142 = vunpack.c.l.b16 %v134
  %v143 = vunpack.c.l.b16 %v135
  %v144 = vunpack.c.l.b16 %v136
  %v145 = vrot.slane %v138, 7
  %vm146 = vcmask 1041409
  %v147 = vsel %vm146, %v145, %v137
  %v148 = vrot.slane %v139, 6
  %vm149 = vcmask 1042434
  %v150 = vsel %vm149, %v148, %v147
  %v151 = vrot.slane %v140, 5
  %vm152 = vcmask 1043459
  %v153 = vsel %vm152, %v151, %v150
  %v154 = vrot.slane %v141, 4
  %vm155 = vcmask 1044484
  %v156 = vsel %vm155, %v154, %v153
  %v157 = vrot.slane %v142, 3
  %vm158 = vcmask 1045509
  %v159 = vsel %vm158, %v157, %v156
  %v160 = vrot.slane %v143, 2
  %vm161 = vcmask 1046534
  %v162 = vsel %vm161, %v160, %v159
  %v163 = vrot.slane %v144, 1
  %vm164 = vcmask 1047559
  %v165 = vsel %vm164, %v163, %v162
  %v166 = vpack.c.b16 %v165, %v165
  %v200 = vunpack.c.l.b16 %v29
  %v201 = vunpack.c.h.b16 %v29
  %v202 = vunpack.c.l.b16 %v30
  %v203 = vunpack.c.h.b16 %v30
  %v204 = vunpack.c.l.b16 %v31
  %v205 = vunpack.c.h.b16 %v31
  %v206 = vunpack.c.l.b16 %v32
  %v207 = vunpack.c.h.b16 %v32
  %v208 = vunpack.c.l.b16 %v33
  %v209 = vunpack.c.h.b16 %v33
  %v210 = vunpack.c.l.b16 %v34
  %v211 = vunpack.c.h.b16 %v34
  %v212 = vunpack.c.l.b16 %v35
  %v213 = vunpack.c.h.b16 %v35
  %v214 = vunpack.c.l.b16 %v36
  %v215 = vunpack.c.h.b16 %v36
  %v216 = vunpack.c.l.b16 %v37
  %v217 = vunpack.c.h.b16 %v37
  %v218 = vunpack.c.l.b16 %v38
  %v219 = vunpack.c.h.b16 %v38
  %v220 = vunpack.c.l.b16 %v39
  %v221 = vunpack.c.h.b16 %v39
  %v222 = vunpack.c.l.b16 %v40
  %v223 = vunpack.c.h.b16 %v40
  %v224 = vunpack.c.l.b16 %v41
  %v225 = vunpack.c.h.b16 %v41
  %v226 = vunpack.c.l.b16 %v42
  %v227 = vunpack.c.h.b16 %v42
  %v228 = vunpack.c.l.b16 %v43
  %v229 = vunpack.c.h.b16 %v43
  %v230 = vunpack.c.l.b16 %v44
  %v231 = vunpack.c.h.b16 %v44
  %v232 = vunpack.c.l.b16 %v45
  %v233 = vunpack.c.h.b16 %v45
  %v234 = vunpack.c.l.b16 %v46
  %v235 = vunpack.c.h.b16 %v46
  %v236 = vunpack.c.l.b16 %v47
  %v237 = vunpack.c.h.b16 %v47
  %v238 = vunpack.c.l.b16 %v48
  %v239 = vunpack.c.h.b16 %v48
  %v240 = vunpack.c.l.b16 %v49
  %v241 = vunpack.c.h.b16 %v49
  %v242 = vunpack.c.l.b16 %v50
  %v243 = vunpack.c.h.b16 %v50
  %v244 = vunpack.c.l.b16 %v51
  %v245 = vunpack.c.h.b16 %v51
  %v246 = vunpack.c.l.b16 %v52
  %v247 = vunpack.c.h.b16 %v52
  %v248 = vunpack.c.l.b16 %v53
  %v249 = vunpack.c.h.b16 %v53
  %v250 = vunpack.c.l.b16 %v54
  %v251 = vunpack.c.h.b16 %v54
  %v252 = vunpack.c.l.b16 %v55
  %v253 = vunpack.c.h.b16 %v55
  %v254 = vunpack.c.l.b16 %v56
  %v255 = vunpack.c.h.b16 %v56
  %v256 = vunpack.c.l.b16 %v57
  %v257 = vunpack.c.h.b16 %v57
  %v258 = vunpack.c.l.b16 %v58
  %v259 = vunpack.c.h.b16 %v58
  %v260 = vunpack.c.l.b16 %v59
  %v261 = vunpack.c.h.b16 %v59
  %v262 = vunpack.c.l.b16 %v60
  %v263 = vunpack.c.h.b16 %v60
  %v264 = vpack.c.b16 %v204, %v200
  %v265 = vpack.c.b16 %v205, %v201
  %v266 = vpack.c.b16 %v206, %v202
  %v267 = vpack.c.b16 %v207, %v203
  %v268 = vpack.c.b16 %v212, %v208
  %v269 = vpack.c.b16 %v213, %v209
  %v270 = vpack.c.b16 %v214, %v210
  %v271 = vpack.c.b16 %v215, %v211
  %v272 = vpack.c.b16 %v220, %v216
  %v273 = vpack.c.b16 %v221, %v217
  %v274 = vpack.c.b16 %v222, %v218
  %v275 = vpack.c.b16 %v223, %v219
  %v276 = vpack.c.b16 %v228, %v224
  %v277 = vpack.c.b16 %v229, %v225
  %v278 = vpack.c.b16 %v230, %v226
  %v279 = vpack.c.b16 %v231, %v227
  %v280 = vpack.c.b16 %v236, %v232
  %v281 = vpack.c.b16 %v237, %v233
  %v282 = vpack.c.b16 %v238, %v234
  %v283 = vpack.c.b16 %v239, %v235
  %v284 = vpack.c.b16 %v244, %v240
  %v285 = vpack.c.b16 %v245, %v241
  %v286 = vpack.c.b16 %v246, %v242
  %v287 = vpack.c.b16 %v247, %v243
  %v288 = vpack.c.b16 %v252, %v248
  %v289 = vpack.c.b16 %v253, %v249
  %v290 = vpack.c.b16 %v254, %v250
  %v291 = vpack.c.b16 %v255, %v251
  %v292 = vpack.c.b16 %v260, %v256
  %v293 = vpack.c.b16 %v261, %v257
  %v294 = vpack.c.b16 %v262, %v258
  %v295 = vpack.c.b16 %v263, %v259
  %328 = vmatpush.bf16.msra.mxu0 %v292
  %329 = vmatpush.bf16.msra.mxu0 %v288
  %330 = vmatpush.bf16.msra.mxu0 %v284
  %331 = vmatpush.bf16.msra.mxu0 %v280
  %332 = vmatpush.bf16.msra.mxu0 %v276
  %333 = vmatpush.bf16.msra.mxu0 %v272
  %334 = vmatpush.bf16.msra.mxu0 %v268
  %335 = vmatpush.bf16.msra.mxu0 %v264
  %336 = vmatmul.bf16.gmra.mxu0 %v166
  %v337 = vpop.f32.mrf.mxu0
  %v338 = vadd.f32 %v105, %v337
  %v339 = vpop.f32.mrf.mxu0
  %340 = vdwg.mxu0
  %341 = vmatpush.bf16.msra.mxu0 %v293
  %342 = vmatpush.bf16.msra.mxu0 %v289
  %343 = vmatpush.bf16.msra.mxu0 %v285
  %344 = vmatpush.bf16.msra.mxu0 %v281
  %345 = vmatpush.bf16.msra.mxu0 %v277
  %346 = vmatpush.bf16.msra.mxu0 %v273
  %347 = vmatpush.bf16.msra.mxu0 %v269
  %348 = vmatpush.bf16.msra.mxu0 %v265
  %349 = vmatmul.bf16.gmra.mxu0 %v166
  %v350 = vpop.f32.mrf.mxu0
  %v351 = vadd.f32 %v106, %v350
  %v352 = vpop.f32.mrf.mxu0
  %353 = vdwg.mxu0
  %354 = vmatpush.bf16.msra.mxu0 %v294
  %355 = vmatpush.bf16.msra.mxu0 %v290
  %356 = vmatpush.bf16.msra.mxu0 %v286
  %357 = vmatpush.bf16.msra.mxu0 %v282
  %358 = vmatpush.bf16.msra.mxu0 %v278
  %359 = vmatpush.bf16.msra.mxu0 %v274
  %360 = vmatpush.bf16.msra.mxu0 %v270
  %361 = vmatpush.bf16.msra.mxu0 %v266
  %362 = vmatmul.bf16.gmra.mxu0 %v166
  %v363 = vpop.f32.mrf.mxu0
  %v364 = vadd.f32 %v107, %v363
  %v365 = vpop.f32.mrf.mxu0
  %366 = vdwg.mxu0
  %367 = vmatpush.bf16.msra.mxu0 %v295
  %368 = vmatpush.bf16.msra.mxu0 %v291
  %369 = vmatpush.bf16.msra.mxu0 %v287
  %370 = vmatpush.bf16.msra.mxu0 %v283
  %371 = vmatpush.bf16.msra.mxu0 %v279
  %372 = vmatpush.bf16.msra.mxu0 %v275
  %373 = vmatpush.bf16.msra.mxu0 %v271
  %374 = vmatpush.bf16.msra.mxu0 %v267
  %375 = vmatmul.bf16.gmra.mxu0 %v166
  %v376 = vpop.f32.mrf.mxu0
  %v377 = vadd.f32 %v108, %v376
  %v378 = vpop.f32.mrf.mxu0
  %379 = vdwg.mxu0
  %v380 = vpack.c.bf16 %v94, %v94
  %v413 = vunpack.c.l.b16 %v61
  %v414 = vunpack.c.h.b16 %v61
  %v415 = vunpack.c.l.b16 %v62
  %v416 = vunpack.c.h.b16 %v62
  %v417 = vunpack.c.l.b16 %v63
  %v418 = vunpack.c.h.b16 %v63
  %v419 = vunpack.c.l.b16 %v64
  %v420 = vunpack.c.h.b16 %v64
  %v421 = vunpack.c.l.b16 %v65
  %v422 = vunpack.c.h.b16 %v65
  %v423 = vunpack.c.l.b16 %v66
  %v424 = vunpack.c.h.b16 %v66
  %v425 = vunpack.c.l.b16 %v67
  %v426 = vunpack.c.h.b16 %v67
  %v427 = vunpack.c.l.b16 %v68
  %v428 = vunpack.c.h.b16 %v68
  %v429 = vunpack.c.l.b16 %v69
  %v430 = vunpack.c.h.b16 %v69
  %v431 = vunpack.c.l.b16 %v70
  %v432 = vunpack.c.h.b16 %v70
  %v433 = vunpack.c.l.b16 %v71
  %v434 = vunpack.c.h.b16 %v71
  %v435 = vunpack.c.l.b16 %v72
  %v436 = vunpack.c.h.b16 %v72
  %v437 = vunpack.c.l.b16 %v73
  %v438 = vunpack.c.h.b16 %v73
  %v439 = vunpack.c.l.b16 %v74
  %v440 = vunpack.c.h.b16 %v74
  %v441 = vunpack.c.l.b16 %v75
  %v442 = vunpack.c.h.b16 %v75
  %v443 = vunpack.c.l.b16 %v76
  %v444 = vunpack.c.h.b16 %v76
  %v445 = vunpack.c.l.b16 %v77
  %v446 = vunpack.c.h.b16 %v77
  %v447 = vunpack.c.l.b16 %v78
  %v448 = vunpack.c.h.b16 %v78
  %v449 = vunpack.c.l.b16 %v79
  %v450 = vunpack.c.h.b16 %v79
  %v451 = vunpack.c.l.b16 %v80
  %v452 = vunpack.c.h.b16 %v80
  %v453 = vunpack.c.l.b16 %v81
  %v454 = vunpack.c.h.b16 %v81
  %v455 = vunpack.c.l.b16 %v82
  %v456 = vunpack.c.h.b16 %v82
  %v457 = vunpack.c.l.b16 %v83
  %v458 = vunpack.c.h.b16 %v83
  %v459 = vunpack.c.l.b16 %v84
  %v460 = vunpack.c.h.b16 %v84
  %v461 = vunpack.c.l.b16 %v85
  %v462 = vunpack.c.h.b16 %v85
  %v463 = vunpack.c.l.b16 %v86
  %v464 = vunpack.c.h.b16 %v86
  %v465 = vunpack.c.l.b16 %v87
  %v466 = vunpack.c.h.b16 %v87
  %v467 = vunpack.c.l.b16 %v88
  %v468 = vunpack.c.h.b16 %v88
  %v469 = vunpack.c.l.b16 %v89
  %v470 = vunpack.c.h.b16 %v89
  %v471 = vunpack.c.l.b16 %v90
  %v472 = vunpack.c.h.b16 %v90
  %v473 = vunpack.c.l.b16 %v91
  %v474 = vunpack.c.h.b16 %v91
  %v475 = vunpack.c.l.b16 %v92
  %v476 = vunpack.c.h.b16 %v92
  %v477 = vpack.c.b16 %v417, %v413
  %v478 = vpack.c.b16 %v418, %v414
  %v479 = vpack.c.b16 %v419, %v415
  %v480 = vpack.c.b16 %v420, %v416
  %v481 = vpack.c.b16 %v425, %v421
  %v482 = vpack.c.b16 %v426, %v422
  %v483 = vpack.c.b16 %v427, %v423
  %v484 = vpack.c.b16 %v428, %v424
  %v485 = vpack.c.b16 %v433, %v429
  %v486 = vpack.c.b16 %v434, %v430
  %v487 = vpack.c.b16 %v435, %v431
  %v488 = vpack.c.b16 %v436, %v432
  %v489 = vpack.c.b16 %v441, %v437
  %v490 = vpack.c.b16 %v442, %v438
  %v491 = vpack.c.b16 %v443, %v439
  %v492 = vpack.c.b16 %v444, %v440
  %v493 = vpack.c.b16 %v449, %v445
  %v494 = vpack.c.b16 %v450, %v446
  %v495 = vpack.c.b16 %v451, %v447
  %v496 = vpack.c.b16 %v452, %v448
  %v497 = vpack.c.b16 %v457, %v453
  %v498 = vpack.c.b16 %v458, %v454
  %v499 = vpack.c.b16 %v459, %v455
  %v500 = vpack.c.b16 %v460, %v456
  %v501 = vpack.c.b16 %v465, %v461
  %v502 = vpack.c.b16 %v466, %v462
  %v503 = vpack.c.b16 %v467, %v463
  %v504 = vpack.c.b16 %v468, %v464
  %v505 = vpack.c.b16 %v473, %v469
  %v506 = vpack.c.b16 %v474, %v470
  %v507 = vpack.c.b16 %v475, %v471
  %v508 = vpack.c.b16 %v476, %v472
  %541 = vmatpush.bf16.msra.mxu0 %v505
  %542 = vmatpush.bf16.msra.mxu0 %v501
  %543 = vmatpush.bf16.msra.mxu0 %v497
  %544 = vmatpush.bf16.msra.mxu0 %v493
  %545 = vmatpush.bf16.msra.mxu0 %v489
  %546 = vmatpush.bf16.msra.mxu0 %v485
  %547 = vmatpush.bf16.msra.mxu0 %v481
  %548 = vmatpush.bf16.msra.mxu0 %v477
  %549 = vmatmul.bf16.gmra.mxu0 %v380
  %v550 = vpop.f32.mrf.mxu0
  %v551 = vadd.f32 0.0, %v550
  %v552 = vpop.f32.mrf.mxu0
  %553 = vdwg.mxu0
  %554 = vmatpush.bf16.msra.mxu0 %v506
  %555 = vmatpush.bf16.msra.mxu0 %v502
  %556 = vmatpush.bf16.msra.mxu0 %v498
  %557 = vmatpush.bf16.msra.mxu0 %v494
  %558 = vmatpush.bf16.msra.mxu0 %v490
  %559 = vmatpush.bf16.msra.mxu0 %v486
  %560 = vmatpush.bf16.msra.mxu0 %v482
  %561 = vmatpush.bf16.msra.mxu0 %v478
  %562 = vmatmul.bf16.gmra.mxu0 %v380
  %v563 = vpop.f32.mrf.mxu0
  %v564 = vadd.f32 0.0, %v563
  %v565 = vpop.f32.mrf.mxu0
  %566 = vdwg.mxu0
  %567 = vmatpush.bf16.msra.mxu0 %v507
  %568 = vmatpush.bf16.msra.mxu0 %v503
  %569 = vmatpush.bf16.msra.mxu0 %v499
  %570 = vmatpush.bf16.msra.mxu0 %v495
  %571 = vmatpush.bf16.msra.mxu0 %v491
  %572 = vmatpush.bf16.msra.mxu0 %v487
  %573 = vmatpush.bf16.msra.mxu0 %v483
  %574 = vmatpush.bf16.msra.mxu0 %v479
  %575 = vmatmul.bf16.gmra.mxu0 %v380
  %v576 = vpop.f32.mrf.mxu0
  %v577 = vadd.f32 0.0, %v576
  %v578 = vpop.f32.mrf.mxu0
  %579 = vdwg.mxu0
  %580 = vmatpush.bf16.msra.mxu0 %v508
  %581 = vmatpush.bf16.msra.mxu0 %v504
  %582 = vmatpush.bf16.msra.mxu0 %v500
  %583 = vmatpush.bf16.msra.mxu0 %v496
  %584 = vmatpush.bf16.msra.mxu0 %v492
  %585 = vmatpush.bf16.msra.mxu0 %v488
  %586 = vmatpush.bf16.msra.mxu0 %v484
  %587 = vmatpush.bf16.msra.mxu0 %v480
  %588 = vmatmul.bf16.gmra.mxu0 %v380
  %v589 = vpop.f32.mrf.mxu0
  %v590 = vadd.f32 0.0, %v589
  %v591 = vpop.f32.mrf.mxu0
  %592 = vdwg.mxu0
  %v593 = vadd.f32 %v338, %v551
  %v594 = vadd.f32 %v351, %v564
  %v595 = vadd.f32 %v364, %v577
  %v596 = vadd.f32 %v377, %v590
  %v597 = vxor.u32 %v593, 2147483648
  %v598 = vmul.f32 %v597, 1.442695
  %v599 = vpow.pop %v598
  %v600 = vadd.f32 %v599, 1.0
  %v601 = vrcp.pop %v600
  %v602 = vmul.f32 %v600, %v601
  %v603 = vsub.f32 1.0, %v602
  %v604 = vmul.f32 %v601, %v603
  %v605 = vadd.f32 %v601, %v604
  %vm606 = vweird.f32 %v600
  %vm607 = vweird.f32 %v601
  %vm608 = vmor %vm606, %vm607
  %v609 = vsel %vm608, %v601, %v605
  %v610 = vand.u32 2147483647, %v600
  %vm611 = vcmp.eq.f32.partialorder %v610, 8.507059e+37
  %v612 = vand.u32 %v600, 2147483648
  %v613 = vor.u32 1.1754944e-38, %v612
  %v614 = vsel %vm611, %v613, %v609
  %v615 = vmul.f32 1.0, %v614
  %v616 = vxor.u32 %v594, 2147483648
  %v617 = vmul.f32 %v616, 1.442695
  %v618 = vpow.pop %v617
  %v619 = vadd.f32 %v618, 1.0
  %v620 = vrcp.pop %v619
  %v621 = vmul.f32 %v619, %v620
  %v622 = vsub.f32 1.0, %v621
  %v623 = vmul.f32 %v620, %v622
  %v624 = vadd.f32 %v620, %v623
  %vm625 = vweird.f32 %v619
  %vm626 = vweird.f32 %v620
  %vm627 = vmor %vm625, %vm626
  %v628 = vsel %vm627, %v620, %v624
  %v629 = vand.u32 2147483647, %v619
  %vm630 = vcmp.eq.f32.partialorder %v629, 8.507059e+37
  %v631 = vand.u32 %v619, 2147483648
  %v632 = vor.u32 1.1754944e-38, %v631
  %v633 = vsel %vm630, %v632, %v628
  %v634 = vmul.f32 1.0, %v633
  %v635 = vtanh.pop %v595
  %v636 = vxor.u32 %v596, 2147483648
  %v637 = vmul.f32 %v636, 1.442695
  %v638 = vpow.pop %v637
  %v639 = vadd.f32 %v638, 1.0
  %v640 = vrcp.pop %v639
  %v641 = vmul.f32 %v639, %v640
  %v642 = vsub.f32 1.0, %v641
  %v643 = vmul.f32 %v640, %v642
  %v644 = vadd.f32 %v640, %v643
  %vm645 = vweird.f32 %v639
  %vm646 = vweird.f32 %v640
  %vm647 = vmor %vm645, %vm646
  %v648 = vsel %vm647, %v640, %v644
  %v649 = vand.u32 2147483647, %v639
  %vm650 = vcmp.eq.f32.partialorder %v649, 8.507059e+37
  %v651 = vand.u32 %v639, 2147483648
  %v652 = vor.u32 1.1754944e-38, %v651
  %v653 = vsel %vm650, %v652, %v648
  %v654 = vmul.f32 1.0, %v653
  %v655 = vmul.f32 %v634, %v95
  %v656 = vmul.f32 %v615, %v635
  %v657 = vadd.f32 %v655, %v656
  %v658 = vtanh.pop %v657
  %v659 = vmul.f32 %v654, %v658
  %v660 = vrot.slane %v137, 1
  %v661 = vsel %vm146, %v138, %v660
  %v662 = vrot.slane %v139, 7
  %v663 = vsel %vm149, %v662, %v661
  %v664 = vrot.slane %v140, 6
  %v665 = vsel %vm152, %v664, %v663
  %v666 = vrot.slane %v141, 5
  %v667 = vsel %vm155, %v666, %v665
  %v668 = vrot.slane %v142, 4
  %v669 = vsel %vm158, %v668, %v667
  %v670 = vrot.slane %v143, 3
  %v671 = vsel %vm161, %v670, %v669
  %v672 = vrot.slane %v144, 2
  %v673 = vsel %vm164, %v672, %v671
  %v674 = vpack.c.b16 %v673, %v673
  %676 = vmatpush.bf16.msra.mxu0 %v292
  %677 = vmatpush.bf16.msra.mxu0 %v288
  %678 = vmatpush.bf16.msra.mxu0 %v284
  %679 = vmatpush.bf16.msra.mxu0 %v280
  %680 = vmatpush.bf16.msra.mxu0 %v276
  %681 = vmatpush.bf16.msra.mxu0 %v272
  %682 = vmatpush.bf16.msra.mxu0 %v268
  %683 = vmatpush.bf16.msra.mxu0 %v264
  %684 = vmatmul.bf16.gmra.mxu0 %v674
  %v685 = vpop.f32.mrf.mxu0
  %v686 = vadd.f32 %v105, %v685
  %v687 = vpop.f32.mrf.mxu0
  %688 = vdwg.mxu0
  %689 = vmatpush.bf16.msra.mxu0 %v293
  %690 = vmatpush.bf16.msra.mxu0 %v289
  %691 = vmatpush.bf16.msra.mxu0 %v285
  %692 = vmatpush.bf16.msra.mxu0 %v281
  %693 = vmatpush.bf16.msra.mxu0 %v277
  %694 = vmatpush.bf16.msra.mxu0 %v273
  %695 = vmatpush.bf16.msra.mxu0 %v269
  %696 = vmatpush.bf16.msra.mxu0 %v265
  %697 = vmatmul.bf16.gmra.mxu0 %v674
  %v698 = vpop.f32.mrf.mxu0
  %v699 = vadd.f32 %v106, %v698
  %v700 = vpop.f32.mrf.mxu0
  %701 = vdwg.mxu0
  %702 = vmatpush.bf16.msra.mxu0 %v294
  %703 = vmatpush.bf16.msra.mxu0 %v290
  %704 = vmatpush.bf16.msra.mxu0 %v286
  %705 = vmatpush.bf16.msra.mxu0 %v282
  %706 = vmatpush.bf16.msra.mxu0 %v278
  %707 = vmatpush.bf16.msra.mxu0 %v274
  %708 = vmatpush.bf16.msra.mxu0 %v270
  %709 = vmatpush.bf16.msra.mxu0 %v266
  %710 = vmatmul.bf16.gmra.mxu0 %v674
  %v711 = vpop.f32.mrf.mxu0
  %v712 = vadd.f32 %v107, %v711
  %v713 = vpop.f32.mrf.mxu0
  %714 = vdwg.mxu0
  %715 = vmatpush.bf16.msra.mxu0 %v295
  %716 = vmatpush.bf16.msra.mxu0 %v291
  %717 = vmatpush.bf16.msra.mxu0 %v287
  %718 = vmatpush.bf16.msra.mxu0 %v283
  %719 = vmatpush.bf16.msra.mxu0 %v279
  %720 = vmatpush.bf16.msra.mxu0 %v275
  %721 = vmatpush.bf16.msra.mxu0 %v271
  %722 = vmatpush.bf16.msra.mxu0 %v267
  %723 = vmatmul.bf16.gmra.mxu0 %v674
  %v724 = vpop.f32.mrf.mxu0
  %v725 = vadd.f32 %v108, %v724
  %v726 = vpop.f32.mrf.mxu0
  %727 = vdwg.mxu0
  %v728 = vpack.c.bf16 %v659, %v659
  %729 = vmatpush.bf16.msra.mxu0 %v505
  %730 = vmatpush.bf16.msra.mxu0 %v501
  %731 = vmatpush.bf16.msra.mxu0 %v497
  %732 = vmatpush.bf16.msra.mxu0 %v493
  %733 = vmatpush.bf16.msra.mxu0 %v489
  %734 = vmatpush.bf16.msra.mxu0 %v485
  %735 = vmatpush.bf16.msra.mxu0 %v481
  %736 = vmatpush.bf16.msra.mxu0 %v477
  %737 = vmatmul.bf16.gmra.mxu0 %v728
  %v738 = vpop.f32.mrf.mxu0
  %v739 = vadd.f32 0.0, %v738
  %v740 = vpop.f32.mrf.mxu0
  %741 = vdwg.mxu0
  %742 = vmatpush.bf16.msra.mxu0 %v506
  %743 = vmatpush.bf16.msra.mxu0 %v502
  %744 = vmatpush.bf16.msra.mxu0 %v498
  %745 = vmatpush.bf16.msra.mxu0 %v494
  %746 = vmatpush.bf16.msra.mxu0 %v490
  %747 = vmatpush.bf16.msra.mxu0 %v486
  %748 = vmatpush.bf16.msra.mxu0 %v482
  %749 = vmatpush.bf16.msra.mxu0 %v478
  %750 = vmatmul.bf16.gmra.mxu0 %v728
  %v751 = vpop.f32.mrf.mxu0
  %v752 = vadd.f32 0.0, %v751
  %v753 = vpop.f32.mrf.mxu0
  %754 = vdwg.mxu0
  %755 = vmatpush.bf16.msra.mxu0 %v507
  %756 = vmatpush.bf16.msra.mxu0 %v503
  %757 = vmatpush.bf16.msra.mxu0 %v499
  %758 = vmatpush.bf16.msra.mxu0 %v495
  %759 = vmatpush.bf16.msra.mxu0 %v491
  %760 = vmatpush.bf16.msra.mxu0 %v487
  %761 = vmatpush.bf16.msra.mxu0 %v483
  %762 = vmatpush.bf16.msra.mxu0 %v479
  %763 = vmatmul.bf16.gmra.mxu0 %v728
  %v764 = vpop.f32.mrf.mxu0
  %v765 = vadd.f32 0.0, %v764
  %v766 = vpop.f32.mrf.mxu0
  %767 = vdwg.mxu0
  %768 = vmatpush.bf16.msra.mxu0 %v508
  %769 = vmatpush.bf16.msra.mxu0 %v504
  %770 = vmatpush.bf16.msra.mxu0 %v500
  %771 = vmatpush.bf16.msra.mxu0 %v496
  %772 = vmatpush.bf16.msra.mxu0 %v492
  %773 = vmatpush.bf16.msra.mxu0 %v488
  %774 = vmatpush.bf16.msra.mxu0 %v484
  %775 = vmatpush.bf16.msra.mxu0 %v480
  %776 = vmatmul.bf16.gmra.mxu0 %v728
  %v777 = vpop.f32.mrf.mxu0
  %v778 = vadd.f32 0.0, %v777
  %v779 = vpop.f32.mrf.mxu0
  %780 = vdwg.mxu0
  %v781 = vadd.f32 %v686, %v739
  %v782 = vadd.f32 %v699, %v752
  %v783 = vadd.f32 %v712, %v765
  %v784 = vadd.f32 %v725, %v778
  %v785 = vxor.u32 %v781, 2147483648
  %v786 = vmul.f32 %v785, 1.442695
  %v787 = vpow.pop %v786
  %v788 = vadd.f32 %v787, 1.0
  %v789 = vrcp.pop %v788
  %v790 = vmul.f32 %v788, %v789
  %v791 = vsub.f32 1.0, %v790
  %v792 = vmul.f32 %v789, %v791
  %v793 = vadd.f32 %v789, %v792
  %vm794 = vweird.f32 %v788
  %vm795 = vweird.f32 %v789
  %vm796 = vmor %vm794, %vm795
  %v797 = vsel %vm796, %v789, %v793
  %v798 = vand.u32 2147483647, %v788
  %vm799 = vcmp.eq.f32.partialorder %v798, 8.507059e+37
  %v800 = vand.u32 %v788, 2147483648
  %v801 = vor.u32 1.1754944e-38, %v800
  %v802 = vsel %vm799, %v801, %v797
  %v803 = vmul.f32 1.0, %v802
  %v804 = vxor.u32 %v782, 2147483648
  %v805 = vmul.f32 %v804, 1.442695
  %v806 = vpow.pop %v805
  %v807 = vadd.f32 %v806, 1.0
  %v808 = vrcp.pop %v807
  %v809 = vmul.f32 %v807, %v808
  %v810 = vsub.f32 1.0, %v809
  %v811 = vmul.f32 %v808, %v810
  %v812 = vadd.f32 %v808, %v811
  %vm813 = vweird.f32 %v807
  %vm814 = vweird.f32 %v808
  %vm815 = vmor %vm813, %vm814
  %v816 = vsel %vm815, %v808, %v812
  %v817 = vand.u32 2147483647, %v807
  %vm818 = vcmp.eq.f32.partialorder %v817, 8.507059e+37
  %v819 = vand.u32 %v807, 2147483648
  %v820 = vor.u32 1.1754944e-38, %v819
  %v821 = vsel %vm818, %v820, %v816
  %v822 = vmul.f32 1.0, %v821
  %v823 = vtanh.pop %v783
  %v824 = vxor.u32 %v784, 2147483648
  %v825 = vmul.f32 %v824, 1.442695
  %v826 = vpow.pop %v825
  %v827 = vadd.f32 %v826, 1.0
  %v828 = vrcp.pop %v827
  %v829 = vmul.f32 %v827, %v828
  %v830 = vsub.f32 1.0, %v829
  %v831 = vmul.f32 %v828, %v830
  %v832 = vadd.f32 %v828, %v831
  %vm833 = vweird.f32 %v827
  %vm834 = vweird.f32 %v828
  %vm835 = vmor %vm833, %vm834
  %v836 = vsel %vm835, %v828, %v832
  %v837 = vand.u32 2147483647, %v827
  %vm838 = vcmp.eq.f32.partialorder %v837, 8.507059e+37
  %v839 = vand.u32 %v827, 2147483648
  %v840 = vor.u32 1.1754944e-38, %v839
  %v841 = vsel %vm838, %v840, %v836
  %v842 = vmul.f32 1.0, %v841
  %v843 = vmul.f32 %v822, %v657
  %v844 = vmul.f32 %v803, %v823
  %v845 = vadd.f32 %v843, %v844
  %v846 = vtanh.pop %v845
  %v847 = vmul.f32 %v842, %v846
  %v848 = vld [vmem:[%s0] sm:$0x2]
  %v849 = vld [vmem:[%s0 + $0x4] sm:$0x2]
  %v850 = vld [vmem:[%s0 + $0x8] sm:$0x2]
  %v851 = vld [vmem:[%s0 + $0xc] sm:$0x2]
  %v852 = vld [vmem:[%s0 + $0x10] sm:$0x2]
  %v853 = vld [vmem:[%s0 + $0x14] sm:$0x2]
  %v854 = vld [vmem:[%s0 + $0x18] sm:$0x2]
  %v855 = vld [vmem:[%s0 + $0x1c] sm:$0x2]
  %v864 = vunpack.c.l.b16 %v848
  %v865 = vunpack.c.l.b16 %v849
  %v866 = vunpack.c.l.b16 %v850
  %v867 = vunpack.c.l.b16 %v851
  %v868 = vunpack.c.l.b16 %v852
  %v869 = vunpack.c.l.b16 %v853
  %v870 = vunpack.c.l.b16 %v854
  %v871 = vunpack.c.l.b16 %v855
  %v872 = vpack.c.b16 %v864, %v864
  %v873 = vpack.c.b16 %v865, %v865
  %v874 = vpack.c.b16 %v866, %v866
  %v875 = vpack.c.b16 %v867, %v867
  %v876 = vpack.c.b16 %v868, %v868
  %v877 = vpack.c.b16 %v869, %v869
  %v878 = vpack.c.b16 %v870, %v870
  %v879 = vpack.c.b16 %v871, %v871
  %v880 = vunpack.c.l.b16 %v872
  %v881 = vunpack.c.l.b16 %v873
  %v882 = vunpack.c.l.b16 %v874
  %v883 = vunpack.c.l.b16 %v875
  %v884 = vunpack.c.l.b16 %v876
  %v885 = vunpack.c.l.b16 %v877
  %v886 = vunpack.c.l.b16 %v878
  %v887 = vunpack.c.l.b16 %v879
  %v888 = vrot.slane %v880, 2
  %v889 = vrot.slane %v881, 1
  %v890 = vsel %vm146, %v889, %v888
  %v891 = vsel %vm149, %v882, %v890
  %v892 = vrot.slane %v883, 7
  %v893 = vsel %vm152, %v892, %v891
  %v894 = vrot.slane %v884, 6
  %v895 = vsel %vm155, %v894, %v893
  %v896 = vrot.slane %v885, 5
  %v897 = vsel %vm158, %v896, %v895
  %v898 = vrot.slane %v886, 4
  %v899 = vsel %vm161, %v898, %v897
  %v900 = vrot.slane %v887, 3
  %v901 = vsel %vm164, %v900, %v899
  %v902 = vpack.c.b16 %v901, %v901
  %904 = vmatpush.bf16.msra.mxu0 %v292
  %905 = vmatpush.bf16.msra.mxu0 %v288
  %906 = vmatpush.bf16.msra.mxu0 %v284
  %907 = vmatpush.bf16.msra.mxu0 %v280
  %908 = vmatpush.bf16.msra.mxu0 %v276
  %909 = vmatpush.bf16.msra.mxu0 %v272
  %910 = vmatpush.bf16.msra.mxu0 %v268
  %911 = vmatpush.bf16.msra.mxu0 %v264
  %912 = vmatmul.bf16.gmra.mxu0 %v902
  %v913 = vpop.f32.mrf.mxu0
  %v914 = vadd.f32 %v105, %v913
  %v915 = vpop.f32.mrf.mxu0
  %916 = vdwg.mxu0
  %917 = vmatpush.bf16.msra.mxu0 %v293
  %918 = vmatpush.bf16.msra.mxu0 %v289
  %919 = vmatpush.bf16.msra.mxu0 %v285
  %920 = vmatpush.bf16.msra.mxu0 %v281
  %921 = vmatpush.bf16.msra.mxu0 %v277
  %922 = vmatpush.bf16.msra.mxu0 %v273
  %923 = vmatpush.bf16.msra.mxu0 %v269
  %924 = vmatpush.bf16.msra.mxu0 %v265
  %925 = vmatmul.bf16.gmra.mxu0 %v902
  %v926 = vpop.f32.mrf.mxu0
  %v927 = vadd.f32 %v106, %v926
  %v928 = vpop.f32.mrf.mxu0
  %929 = vdwg.mxu0
  %930 = vmatpush.bf16.msra.mxu0 %v294
  %931 = vmatpush.bf16.msra.mxu0 %v290
  %932 = vmatpush.bf16.msra.mxu0 %v286
  %933 = vmatpush.bf16.msra.mxu0 %v282
  %934 = vmatpush.bf16.msra.mxu0 %v278
  %935 = vmatpush.bf16.msra.mxu0 %v274
  %936 = vmatpush.bf16.msra.mxu0 %v270
  %937 = vmatpush.bf16.msra.mxu0 %v266
  %938 = vmatmul.bf16.gmra.mxu0 %v902
  %v939 = vpop.f32.mrf.mxu0
  %v940 = vadd.f32 %v107, %v939
  %v941 = vpop.f32.mrf.mxu0
  %942 = vdwg.mxu0
  %943 = vmatpush.bf16.msra.mxu0 %v295
  %944 = vmatpush.bf16.msra.mxu0 %v291
  %945 = vmatpush.bf16.msra.mxu0 %v287
  %946 = vmatpush.bf16.msra.mxu0 %v283
  %947 = vmatpush.bf16.msra.mxu0 %v279
  %948 = vmatpush.bf16.msra.mxu0 %v275
  %949 = vmatpush.bf16.msra.mxu0 %v271
  %950 = vmatpush.bf16.msra.mxu0 %v267
  %951 = vmatmul.bf16.gmra.mxu0 %v902
  %v952 = vpop.f32.mrf.mxu0
  %v953 = vadd.f32 %v108, %v952
  %v954 = vpop.f32.mrf.mxu0
  %955 = vdwg.mxu0
  %v956 = vpack.c.bf16 %v847, %v847
  %957 = vmatpush.bf16.msra.mxu0 %v505
  %958 = vmatpush.bf16.msra.mxu0 %v501
  %959 = vmatpush.bf16.msra.mxu0 %v497
  %960 = vmatpush.bf16.msra.mxu0 %v493
  %961 = vmatpush.bf16.msra.mxu0 %v489
  %962 = vmatpush.bf16.msra.mxu0 %v485
  %963 = vmatpush.bf16.msra.mxu0 %v481
  %964 = vmatpush.bf16.msra.mxu0 %v477
  %965 = vmatmul.bf16.gmra.mxu0 %v956
  %v966 = vpop.f32.mrf.mxu0
  %v967 = vadd.f32 0.0, %v966
  %v968 = vpop.f32.mrf.mxu0
  %969 = vdwg.mxu0
  %970 = vmatpush.bf16.msra.mxu0 %v506
  %971 = vmatpush.bf16.msra.mxu0 %v502
  %972 = vmatpush.bf16.msra.mxu0 %v498
  %973 = vmatpush.bf16.msra.mxu0 %v494
  %974 = vmatpush.bf16.msra.mxu0 %v490
  %975 = vmatpush.bf16.msra.mxu0 %v486
  %976 = vmatpush.bf16.msra.mxu0 %v482
  %977 = vmatpush.bf16.msra.mxu0 %v478
  %978 = vmatmul.bf16.gmra.mxu0 %v956
  %v979 = vpop.f32.mrf.mxu0
  %v980 = vadd.f32 0.0, %v979
  %v981 = vpop.f32.mrf.mxu0
  %982 = vdwg.mxu0
  %983 = vmatpush.bf16.msra.mxu0 %v507
  %984 = vmatpush.bf16.msra.mxu0 %v503
  %985 = vmatpush.bf16.msra.mxu0 %v499
  %986 = vmatpush.bf16.msra.mxu0 %v495
  %987 = vmatpush.bf16.msra.mxu0 %v491
  %988 = vmatpush.bf16.msra.mxu0 %v487
  %989 = vmatpush.bf16.msra.mxu0 %v483
  %990 = vmatpush.bf16.msra.mxu0 %v479
  %991 = vmatmul.bf16.gmra.mxu0 %v956
  %v992 = vpop.f32.mrf.mxu0
  %v993 = vadd.f32 0.0, %v992
  %v994 = vpop.f32.mrf.mxu0
  %995 = vdwg.mxu0
  %996 = vmatpush.bf16.msra.mxu0 %v508
  %997 = vmatpush.bf16.msra.mxu0 %v504
  %998 = vmatpush.bf16.msra.mxu0 %v500
  %999 = vmatpush.bf16.msra.mxu0 %v496
  %1000 = vmatpush.bf16.msra.mxu0 %v492
  %1001 = vmatpush.bf16.msra.mxu0 %v488
  %1002 = vmatpush.bf16.msra.mxu0 %v484
  %1003 = vmatpush.bf16.msra.mxu0 %v480
  %1004 = vmatmul.bf16.gmra.mxu0 %v956
  %v1005 = vpop.f32.mrf.mxu0
  %v1006 = vadd.f32 0.0, %v1005
  %v1007 = vpop.f32.mrf.mxu0
  %1008 = vdwg.mxu0
  %v1009 = vadd.f32 %v914, %v967
  %v1010 = vadd.f32 %v927, %v980
  %v1011 = vadd.f32 %v940, %v993
  %v1012 = vadd.f32 %v953, %v1006
  %v1013 = vxor.u32 %v1009, 2147483648
  %v1014 = vmul.f32 %v1013, 1.442695
  %v1015 = vpow.pop %v1014
  %v1016 = vadd.f32 %v1015, 1.0
  %v1017 = vrcp.pop %v1016
  %v1018 = vmul.f32 %v1016, %v1017
  %v1019 = vsub.f32 1.0, %v1018
  %v1020 = vmul.f32 %v1017, %v1019
  %v1021 = vadd.f32 %v1017, %v1020
  %vm1022 = vweird.f32 %v1016
  %vm1023 = vweird.f32 %v1017
  %vm1024 = vmor %vm1022, %vm1023
  %v1025 = vsel %vm1024, %v1017, %v1021
  %v1026 = vand.u32 2147483647, %v1016
  %vm1027 = vcmp.eq.f32.partialorder %v1026, 8.507059e+37
  %v1028 = vand.u32 %v1016, 2147483648
  %v1029 = vor.u32 1.1754944e-38, %v1028
  %v1030 = vsel %vm1027, %v1029, %v1025
  %v1031 = vmul.f32 1.0, %v1030
  %v1032 = vxor.u32 %v1010, 2147483648
  %v1033 = vmul.f32 %v1032, 1.442695
  %v1034 = vpow.pop %v1033
  %v1035 = vadd.f32 %v1034, 1.0
  %v1036 = vrcp.pop %v1035
  %v1037 = vmul.f32 %v1035, %v1036
  %v1038 = vsub.f32 1.0, %v1037
  %v1039 = vmul.f32 %v1036, %v1038
  %v1040 = vadd.f32 %v1036, %v1039
  %vm1041 = vweird.f32 %v1035
  %vm1042 = vweird.f32 %v1036
  %vm1043 = vmor %vm1041, %vm1042
  %v1044 = vsel %vm1043, %v1036, %v1040
  %v1045 = vand.u32 2147483647, %v1035
  %vm1046 = vcmp.eq.f32.partialorder %v1045, 8.507059e+37
  %v1047 = vand.u32 %v1035, 2147483648
  %v1048 = vor.u32 1.1754944e-38, %v1047
  %v1049 = vsel %vm1046, %v1048, %v1044
  %v1050 = vmul.f32 1.0, %v1049
  %v1051 = vtanh.pop %v1011
  %v1052 = vxor.u32 %v1012, 2147483648
  %v1053 = vmul.f32 %v1052, 1.442695
  %v1054 = vpow.pop %v1053
  %v1055 = vadd.f32 %v1054, 1.0
  %v1056 = vrcp.pop %v1055
  %v1057 = vmul.f32 %v1055, %v1056
  %v1058 = vsub.f32 1.0, %v1057
  %v1059 = vmul.f32 %v1056, %v1058
  %v1060 = vadd.f32 %v1056, %v1059
  %vm1061 = vweird.f32 %v1055
  %vm1062 = vweird.f32 %v1056
  %vm1063 = vmor %vm1061, %vm1062
  %v1064 = vsel %vm1063, %v1056, %v1060
  %v1065 = vand.u32 2147483647, %v1055
  %vm1066 = vcmp.eq.f32.partialorder %v1065, 8.507059e+37
  %v1067 = vand.u32 %v1055, 2147483648
  %v1068 = vor.u32 1.1754944e-38, %v1067
  %v1069 = vsel %vm1066, %v1068, %v1064
  %v1070 = vmul.f32 1.0, %v1069
  %v1071 = vmul.f32 %v1050, %v845
  %v1072 = vmul.f32 %v1031, %v1051
  %v1073 = vadd.f32 %v1071, %v1072
  %v1074 = vtanh.pop %v1073
  %v1075 = vmul.f32 %v1070, %v1074
  %v1076 = vrot.slane %v880, 3
  %v1077 = vrot.slane %v881, 2
  %v1078 = vsel %vm146, %v1077, %v1076
  %v1079 = vrot.slane %v882, 1
  %v1080 = vsel %vm149, %v1079, %v1078
  %v1081 = vsel %vm152, %v883, %v1080
  %v1082 = vrot.slane %v884, 7
  %v1083 = vsel %vm155, %v1082, %v1081
  %v1084 = vrot.slane %v885, 6
  %v1085 = vsel %vm158, %v1084, %v1083
  %v1086 = vrot.slane %v886, 5
  %v1087 = vsel %vm161, %v1086, %v1085
  %v1088 = vrot.slane %v887, 4
  %v1089 = vsel %vm164, %v1088, %v1087
  %v1090 = vpack.c.b16 %v1089, %v1089
  %1092 = vmatpush.bf16.msra.mxu0 %v292
  %1093 = vmatpush.bf16.msra.mxu0 %v288
  %1094 = vmatpush.bf16.msra.mxu0 %v284
  %1095 = vmatpush.bf16.msra.mxu0 %v280
  %1096 = vmatpush.bf16.msra.mxu0 %v276
  %1097 = vmatpush.bf16.msra.mxu0 %v272
  %1098 = vmatpush.bf16.msra.mxu0 %v268
  %1099 = vmatpush.bf16.msra.mxu0 %v264
  %1100 = vmatmul.bf16.gmra.mxu0 %v1090
  %v1101 = vpop.f32.mrf.mxu0
  %v1102 = vadd.f32 %v105, %v1101
  %v1103 = vpop.f32.mrf.mxu0
  %1104 = vdwg.mxu0
  %1105 = vmatpush.bf16.msra.mxu0 %v293
  %1106 = vmatpush.bf16.msra.mxu0 %v289
  %1107 = vmatpush.bf16.msra.mxu0 %v285
  %1108 = vmatpush.bf16.msra.mxu0 %v281
  %1109 = vmatpush.bf16.msra.mxu0 %v277
  %1110 = vmatpush.bf16.msra.mxu0 %v273
  %1111 = vmatpush.bf16.msra.mxu0 %v269
  %1112 = vmatpush.bf16.msra.mxu0 %v265
  %1113 = vmatmul.bf16.gmra.mxu0 %v1090
  %v1114 = vpop.f32.mrf.mxu0
  %v1115 = vadd.f32 %v106, %v1114
  %v1116 = vpop.f32.mrf.mxu0
  %1117 = vdwg.mxu0
  %1118 = vmatpush.bf16.msra.mxu0 %v294
  %1119 = vmatpush.bf16.msra.mxu0 %v290
  %1120 = vmatpush.bf16.msra.mxu0 %v286
  %1121 = vmatpush.bf16.msra.mxu0 %v282
  %1122 = vmatpush.bf16.msra.mxu0 %v278
  %1123 = vmatpush.bf16.msra.mxu0 %v274
  %1124 = vmatpush.bf16.msra.mxu0 %v270
  %1125 = vmatpush.bf16.msra.mxu0 %v266
  %1126 = vmatmul.bf16.gmra.mxu0 %v1090
  %v1127 = vpop.f32.mrf.mxu0
  %v1128 = vadd.f32 %v107, %v1127
  %v1129 = vpop.f32.mrf.mxu0
  %1130 = vdwg.mxu0
  %1131 = vmatpush.bf16.msra.mxu0 %v295
  %1132 = vmatpush.bf16.msra.mxu0 %v291
  %1133 = vmatpush.bf16.msra.mxu0 %v287
  %1134 = vmatpush.bf16.msra.mxu0 %v283
  %1135 = vmatpush.bf16.msra.mxu0 %v279
  %1136 = vmatpush.bf16.msra.mxu0 %v275
  %1137 = vmatpush.bf16.msra.mxu0 %v271
  %1138 = vmatpush.bf16.msra.mxu0 %v267
  %1139 = vmatmul.bf16.gmra.mxu0 %v1090
  %v1140 = vpop.f32.mrf.mxu0
  %v1141 = vadd.f32 %v108, %v1140
  %v1142 = vpop.f32.mrf.mxu0
  %1143 = vdwg.mxu0
  %v1144 = vpack.c.bf16 %v1075, %v1075
  %1145 = vmatpush.bf16.msra.mxu0 %v505
  %1146 = vmatpush.bf16.msra.mxu0 %v501
  %1147 = vmatpush.bf16.msra.mxu0 %v497
  %1148 = vmatpush.bf16.msra.mxu0 %v493
  %1149 = vmatpush.bf16.msra.mxu0 %v489
  %1150 = vmatpush.bf16.msra.mxu0 %v485
  %1151 = vmatpush.bf16.msra.mxu0 %v481
  %1152 = vmatpush.bf16.msra.mxu0 %v477
  %1153 = vmatmul.bf16.gmra.mxu0 %v1144
  %v1154 = vpop.f32.mrf.mxu0
  %v1155 = vadd.f32 0.0, %v1154
  %v1156 = vpop.f32.mrf.mxu0
  %1157 = vdwg.mxu0
  %1158 = vmatpush.bf16.msra.mxu0 %v506
  %1159 = vmatpush.bf16.msra.mxu0 %v502
  %1160 = vmatpush.bf16.msra.mxu0 %v498
  %1161 = vmatpush.bf16.msra.mxu0 %v494
  %1162 = vmatpush.bf16.msra.mxu0 %v490
  %1163 = vmatpush.bf16.msra.mxu0 %v486
  %1164 = vmatpush.bf16.msra.mxu0 %v482
  %1165 = vmatpush.bf16.msra.mxu0 %v478
  %1166 = vmatmul.bf16.gmra.mxu0 %v1144
  %v1167 = vpop.f32.mrf.mxu0
  %v1168 = vadd.f32 0.0, %v1167
  %v1169 = vpop.f32.mrf.mxu0
  %1170 = vdwg.mxu0
  %1171 = vmatpush.bf16.msra.mxu0 %v507
  %1172 = vmatpush.bf16.msra.mxu0 %v503
  %1173 = vmatpush.bf16.msra.mxu0 %v499
  %1174 = vmatpush.bf16.msra.mxu0 %v495
  %1175 = vmatpush.bf16.msra.mxu0 %v491
  %1176 = vmatpush.bf16.msra.mxu0 %v487
  %1177 = vmatpush.bf16.msra.mxu0 %v483
  %1178 = vmatpush.bf16.msra.mxu0 %v479
  %1179 = vmatmul.bf16.gmra.mxu0 %v1144
  %v1180 = vpop.f32.mrf.mxu0
  %v1181 = vadd.f32 0.0, %v1180
  %v1182 = vpop.f32.mrf.mxu0
  %1183 = vdwg.mxu0
  %1184 = vmatpush.bf16.msra.mxu0 %v508
  %1185 = vmatpush.bf16.msra.mxu0 %v504
  %1186 = vmatpush.bf16.msra.mxu0 %v500
  %1187 = vmatpush.bf16.msra.mxu0 %v496
  %1188 = vmatpush.bf16.msra.mxu0 %v492
  %1189 = vmatpush.bf16.msra.mxu0 %v488
  %1190 = vmatpush.bf16.msra.mxu0 %v484
  %1191 = vmatpush.bf16.msra.mxu0 %v480
  %1192 = vmatmul.bf16.gmra.mxu0 %v1144
  %v1193 = vpop.f32.mrf.mxu0
  %v1194 = vadd.f32 0.0, %v1193
  %v1195 = vpop.f32.mrf.mxu0
  %1196 = vdwg.mxu0
  %v1197 = vadd.f32 %v1102, %v1155
  %v1198 = vadd.f32 %v1115, %v1168
  %v1199 = vadd.f32 %v1128, %v1181
  %v1200 = vadd.f32 %v1141, %v1194
  %v1201 = vxor.u32 %v1197, 2147483648
  %v1202 = vmul.f32 %v1201, 1.442695
  %v1203 = vpow.pop %v1202
  %v1204 = vadd.f32 %v1203, 1.0
  %v1205 = vrcp.pop %v1204
  %v1206 = vmul.f32 %v1204, %v1205
  %v1207 = vsub.f32 1.0, %v1206
  %v1208 = vmul.f32 %v1205, %v1207
  %v1209 = vadd.f32 %v1205, %v1208
  %vm1210 = vweird.f32 %v1204
  %vm1211 = vweird.f32 %v1205
  %vm1212 = vmor %vm1210, %vm1211
  %v1213 = vsel %vm1212, %v1205, %v1209
  %v1214 = vand.u32 2147483647, %v1204
  %vm1215 = vcmp.eq.f32.partialorder %v1214, 8.507059e+37
  %v1216 = vand.u32 %v1204, 2147483648
  %v1217 = vor.u32 1.1754944e-38, %v1216
  %v1218 = vsel %vm1215, %v1217, %v1213
  %v1219 = vmul.f32 1.0, %v1218
  %v1220 = vxor.u32 %v1198, 2147483648
  %v1221 = vmul.f32 %v1220, 1.442695
  %v1222 = vpow.pop %v1221
  %v1223 = vadd.f32 %v1222, 1.0
  %v1224 = vrcp.pop %v1223
  %v1225 = vmul.f32 %v1223, %v1224
  %v1226 = vsub.f32 1.0, %v1225
  %v1227 = vmul.f32 %v1224, %v1226
  %v1228 = vadd.f32 %v1224, %v1227
  %vm1229 = vweird.f32 %v1223
  %vm1230 = vweird.f32 %v1224
  %vm1231 = vmor %vm1229, %vm1230
  %v1232 = vsel %vm1231, %v1224, %v1228
  %v1233 = vand.u32 2147483647, %v1223
  %vm1234 = vcmp.eq.f32.partialorder %v1233, 8.507059e+37
  %v1235 = vand.u32 %v1223, 2147483648
  %v1236 = vor.u32 1.1754944e-38, %v1235
  %v1237 = vsel %vm1234, %v1236, %v1232
  %v1238 = vmul.f32 1.0, %v1237
  %v1239 = vtanh.pop %v1199
  %v1240 = vxor.u32 %v1200, 2147483648
  %v1241 = vmul.f32 %v1240, 1.442695
  %v1242 = vpow.pop %v1241
  %v1243 = vadd.f32 %v1242, 1.0
  %v1244 = vrcp.pop %v1243
  %v1245 = vmul.f32 %v1243, %v1244
  %v1246 = vsub.f32 1.0, %v1245
  %v1247 = vmul.f32 %v1244, %v1246
  %v1248 = vadd.f32 %v1244, %v1247
  %vm1249 = vweird.f32 %v1243
  %vm1250 = vweird.f32 %v1244
  %vm1251 = vmor %vm1249, %vm1250
  %v1252 = vsel %vm1251, %v1244, %v1248
  %v1253 = vand.u32 2147483647, %v1243
  %vm1254 = vcmp.eq.f32.partialorder %v1253, 8.507059e+37
  %v1255 = vand.u32 %v1243, 2147483648
  %v1256 = vor.u32 1.1754944e-38, %v1255
  %v1257 = vsel %vm1254, %v1256, %v1252
  %v1258 = vmul.f32 1.0, %v1257
  %v1259 = vmul.f32 %v1238, %v1073
  %v1260 = vmul.f32 %v1219, %v1239
  %v1261 = vadd.f32 %v1259, %v1260
  %v1262 = vtanh.pop %v1261
  %v1263 = vmul.f32 %v1258, %v1262
  %v1264 = vld [vmem:[%s0] sm:$0x4]
  %v1265 = vld [vmem:[%s0 + $0x4] sm:$0x4]
  %v1266 = vld [vmem:[%s0 + $0x8] sm:$0x4]
  %v1267 = vld [vmem:[%s0 + $0xc] sm:$0x4]
  %v1268 = vld [vmem:[%s0 + $0x10] sm:$0x4]
  %v1269 = vld [vmem:[%s0 + $0x14] sm:$0x4]
  %v1270 = vld [vmem:[%s0 + $0x18] sm:$0x4]
  %v1271 = vld [vmem:[%s0 + $0x1c] sm:$0x4]
  %v1280 = vunpack.c.l.b16 %v1264
  %v1281 = vunpack.c.l.b16 %v1265
  %v1282 = vunpack.c.l.b16 %v1266
  %v1283 = vunpack.c.l.b16 %v1267
  %v1284 = vunpack.c.l.b16 %v1268
  %v1285 = vunpack.c.l.b16 %v1269
  %v1286 = vunpack.c.l.b16 %v1270
  %v1287 = vunpack.c.l.b16 %v1271
  %v1288 = vpack.c.b16 %v1280, %v1280
  %v1289 = vpack.c.b16 %v1281, %v1281
  %v1290 = vpack.c.b16 %v1282, %v1282
  %v1291 = vpack.c.b16 %v1283, %v1283
  %v1292 = vpack.c.b16 %v1284, %v1284
  %v1293 = vpack.c.b16 %v1285, %v1285
  %v1294 = vpack.c.b16 %v1286, %v1286
  %v1295 = vpack.c.b16 %v1287, %v1287
  %v1296 = vunpack.c.l.b16 %v1288
  %v1297 = vunpack.c.l.b16 %v1289
  %v1298 = vunpack.c.l.b16 %v1290
  %v1299 = vunpack.c.l.b16 %v1291
  %v1300 = vunpack.c.l.b16 %v1292
  %v1301 = vunpack.c.l.b16 %v1293
  %v1302 = vunpack.c.l.b16 %v1294
  %v1303 = vunpack.c.l.b16 %v1295
  %v1304 = vrot.slane %v1296, 4
  %v1305 = vrot.slane %v1297, 3
  %v1306 = vsel %vm146, %v1305, %v1304
  %v1307 = vrot.slane %v1298, 2
  %v1308 = vsel %vm149, %v1307, %v1306
  %v1309 = vrot.slane %v1299, 1
  %v1310 = vsel %vm152, %v1309, %v1308
  %v1311 = vsel %vm155, %v1300, %v1310
  %v1312 = vrot.slane %v1301, 7
  %v1313 = vsel %vm158, %v1312, %v1311
  %v1314 = vrot.slane %v1302, 6
  %v1315 = vsel %vm161, %v1314, %v1313
  %v1316 = vrot.slane %v1303, 5
  %v1317 = vsel %vm164, %v1316, %v1315
  %v1318 = vpack.c.b16 %v1317, %v1317
  %1320 = vmatpush.bf16.msra.mxu0 %v292
  %1321 = vmatpush.bf16.msra.mxu0 %v288
  %1322 = vmatpush.bf16.msra.mxu0 %v284
  %1323 = vmatpush.bf16.msra.mxu0 %v280
  %1324 = vmatpush.bf16.msra.mxu0 %v276
  %1325 = vmatpush.bf16.msra.mxu0 %v272
  %1326 = vmatpush.bf16.msra.mxu0 %v268
  %1327 = vmatpush.bf16.msra.mxu0 %v264
  %1328 = vmatmul.bf16.gmra.mxu0 %v1318
  %v1329 = vpop.f32.mrf.mxu0
  %v1330 = vadd.f32 %v105, %v1329
  %v1331 = vpop.f32.mrf.mxu0
  %1332 = vdwg.mxu0
  %1333 = vmatpush.bf16.msra.mxu0 %v293
  %1334 = vmatpush.bf16.msra.mxu0 %v289
  %1335 = vmatpush.bf16.msra.mxu0 %v285
  %1336 = vmatpush.bf16.msra.mxu0 %v281
  %1337 = vmatpush.bf16.msra.mxu0 %v277
  %1338 = vmatpush.bf16.msra.mxu0 %v273
  %1339 = vmatpush.bf16.msra.mxu0 %v269
  %1340 = vmatpush.bf16.msra.mxu0 %v265
  %1341 = vmatmul.bf16.gmra.mxu0 %v1318
  %v1342 = vpop.f32.mrf.mxu0
  %v1343 = vadd.f32 %v106, %v1342
  %v1344 = vpop.f32.mrf.mxu0
  %1345 = vdwg.mxu0
  %1346 = vmatpush.bf16.msra.mxu0 %v294
  %1347 = vmatpush.bf16.msra.mxu0 %v290
  %1348 = vmatpush.bf16.msra.mxu0 %v286
  %1349 = vmatpush.bf16.msra.mxu0 %v282
  %1350 = vmatpush.bf16.msra.mxu0 %v278
  %1351 = vmatpush.bf16.msra.mxu0 %v274
  %1352 = vmatpush.bf16.msra.mxu0 %v270
  %1353 = vmatpush.bf16.msra.mxu0 %v266
  %1354 = vmatmul.bf16.gmra.mxu0 %v1318
  %v1355 = vpop.f32.mrf.mxu0
  %v1356 = vadd.f32 %v107, %v1355
  %v1357 = vpop.f32.mrf.mxu0
  %1358 = vdwg.mxu0
  %1359 = vmatpush.bf16.msra.mxu0 %v295
  %1360 = vmatpush.bf16.msra.mxu0 %v291
  %1361 = vmatpush.bf16.msra.mxu0 %v287
  %1362 = vmatpush.bf16.msra.mxu0 %v283
  %1363 = vmatpush.bf16.msra.mxu0 %v279
  %1364 = vmatpush.bf16.msra.mxu0 %v275
  %1365 = vmatpush.bf16.msra.mxu0 %v271
  %1366 = vmatpush.bf16.msra.mxu0 %v267
  %1367 = vmatmul.bf16.gmra.mxu0 %v1318
  %v1368 = vpop.f32.mrf.mxu0
  %v1369 = vadd.f32 %v108, %v1368
  %v1370 = vpop.f32.mrf.mxu0
  %1371 = vdwg.mxu0
  %v1372 = vpack.c.bf16 %v1263, %v1263
  %1373 = vmatpush.bf16.msra.mxu0 %v505
  %1374 = vmatpush.bf16.msra.mxu0 %v501
  %1375 = vmatpush.bf16.msra.mxu0 %v497
  %1376 = vmatpush.bf16.msra.mxu0 %v493
  %1377 = vmatpush.bf16.msra.mxu0 %v489
  %1378 = vmatpush.bf16.msra.mxu0 %v485
  %1379 = vmatpush.bf16.msra.mxu0 %v481
  %1380 = vmatpush.bf16.msra.mxu0 %v477
  %1381 = vmatmul.bf16.gmra.mxu0 %v1372
  %v1382 = vpop.f32.mrf.mxu0
  %v1383 = vadd.f32 0.0, %v1382
  %v1384 = vpop.f32.mrf.mxu0
  %1385 = vdwg.mxu0
  %1386 = vmatpush.bf16.msra.mxu0 %v506
  %1387 = vmatpush.bf16.msra.mxu0 %v502
  %1388 = vmatpush.bf16.msra.mxu0 %v498
  %1389 = vmatpush.bf16.msra.mxu0 %v494
  %1390 = vmatpush.bf16.msra.mxu0 %v490
  %1391 = vmatpush.bf16.msra.mxu0 %v486
  %1392 = vmatpush.bf16.msra.mxu0 %v482
  %1393 = vmatpush.bf16.msra.mxu0 %v478
  %1394 = vmatmul.bf16.gmra.mxu0 %v1372
  %v1395 = vpop.f32.mrf.mxu0
  %v1396 = vadd.f32 0.0, %v1395
  %v1397 = vpop.f32.mrf.mxu0
  %1398 = vdwg.mxu0
  %1399 = vmatpush.bf16.msra.mxu0 %v507
  %1400 = vmatpush.bf16.msra.mxu0 %v503
  %1401 = vmatpush.bf16.msra.mxu0 %v499
  %1402 = vmatpush.bf16.msra.mxu0 %v495
  %1403 = vmatpush.bf16.msra.mxu0 %v491
  %1404 = vmatpush.bf16.msra.mxu0 %v487
  %1405 = vmatpush.bf16.msra.mxu0 %v483
  %1406 = vmatpush.bf16.msra.mxu0 %v479
  %1407 = vmatmul.bf16.gmra.mxu0 %v1372
  %v1408 = vpop.f32.mrf.mxu0
  %v1409 = vadd.f32 0.0, %v1408
  %v1410 = vpop.f32.mrf.mxu0
  %1411 = vdwg.mxu0
  %1412 = vmatpush.bf16.msra.mxu0 %v508
  %1413 = vmatpush.bf16.msra.mxu0 %v504
  %1414 = vmatpush.bf16.msra.mxu0 %v500
  %1415 = vmatpush.bf16.msra.mxu0 %v496
  %1416 = vmatpush.bf16.msra.mxu0 %v492
  %1417 = vmatpush.bf16.msra.mxu0 %v488
  %1418 = vmatpush.bf16.msra.mxu0 %v484
  %1419 = vmatpush.bf16.msra.mxu0 %v480
  %1420 = vmatmul.bf16.gmra.mxu0 %v1372
  %v1421 = vpop.f32.mrf.mxu0
  %v1422 = vadd.f32 0.0, %v1421
  %v1423 = vpop.f32.mrf.mxu0
  %1424 = vdwg.mxu0
  %v1425 = vadd.f32 %v1330, %v1383
  %v1426 = vadd.f32 %v1343, %v1396
  %v1427 = vadd.f32 %v1356, %v1409
  %v1428 = vadd.f32 %v1369, %v1422
  %v1429 = vxor.u32 %v1425, 2147483648
  %v1430 = vmul.f32 %v1429, 1.442695
  %v1431 = vpow.pop %v1430
  %v1432 = vadd.f32 %v1431, 1.0
  %v1433 = vrcp.pop %v1432
  %v1434 = vmul.f32 %v1432, %v1433
  %v1435 = vsub.f32 1.0, %v1434
  %v1436 = vmul.f32 %v1433, %v1435
  %v1437 = vadd.f32 %v1433, %v1436
  %vm1438 = vweird.f32 %v1432
  %vm1439 = vweird.f32 %v1433
  %vm1440 = vmor %vm1438, %vm1439
  %v1441 = vsel %vm1440, %v1433, %v1437
  %v1442 = vand.u32 2147483647, %v1432
  %vm1443 = vcmp.eq.f32.partialorder %v1442, 8.507059e+37
  %v1444 = vand.u32 %v1432, 2147483648
  %v1445 = vor.u32 1.1754944e-38, %v1444
  %v1446 = vsel %vm1443, %v1445, %v1441
  %v1447 = vmul.f32 1.0, %v1446
  %v1448 = vxor.u32 %v1426, 2147483648
  %v1449 = vmul.f32 %v1448, 1.442695
  %v1450 = vpow.pop %v1449
  %v1451 = vadd.f32 %v1450, 1.0
  %v1452 = vrcp.pop %v1451
  %v1453 = vmul.f32 %v1451, %v1452
  %v1454 = vsub.f32 1.0, %v1453
  %v1455 = vmul.f32 %v1452, %v1454
  %v1456 = vadd.f32 %v1452, %v1455
  %vm1457 = vweird.f32 %v1451
  %vm1458 = vweird.f32 %v1452
  %vm1459 = vmor %vm1457, %vm1458
  %v1460 = vsel %vm1459, %v1452, %v1456
  %v1461 = vand.u32 2147483647, %v1451
  %vm1462 = vcmp.eq.f32.partialorder %v1461, 8.507059e+37
  %v1463 = vand.u32 %v1451, 2147483648
  %v1464 = vor.u32 1.1754944e-38, %v1463
  %v1465 = vsel %vm1462, %v1464, %v1460
  %v1466 = vmul.f32 1.0, %v1465
  %v1467 = vtanh.pop %v1427
  %v1468 = vxor.u32 %v1428, 2147483648
  %v1469 = vmul.f32 %v1468, 1.442695
  %v1470 = vpow.pop %v1469
  %v1471 = vadd.f32 %v1470, 1.0
  %v1472 = vrcp.pop %v1471
  %v1473 = vmul.f32 %v1471, %v1472
  %v1474 = vsub.f32 1.0, %v1473
  %v1475 = vmul.f32 %v1472, %v1474
  %v1476 = vadd.f32 %v1472, %v1475
  %vm1477 = vweird.f32 %v1471
  %vm1478 = vweird.f32 %v1472
  %vm1479 = vmor %vm1477, %vm1478
  %v1480 = vsel %vm1479, %v1472, %v1476
  %v1481 = vand.u32 2147483647, %v1471
  %vm1482 = vcmp.eq.f32.partialorder %v1481, 8.507059e+37
  %v1483 = vand.u32 %v1471, 2147483648
  %v1484 = vor.u32 1.1754944e-38, %v1483
  %v1485 = vsel %vm1482, %v1484, %v1480
  %v1486 = vmul.f32 1.0, %v1485
  %v1487 = vmul.f32 %v1466, %v1261
  %v1488 = vmul.f32 %v1447, %v1467
  %v1489 = vadd.f32 %v1487, %v1488
  %v1490 = vtanh.pop %v1489
  %v1491 = vmul.f32 %v1486, %v1490
  %v1492 = vrot.slane %v1296, 5
  %v1493 = vrot.slane %v1297, 4
  %v1494 = vsel %vm146, %v1493, %v1492
  %v1495 = vrot.slane %v1298, 3
  %v1496 = vsel %vm149, %v1495, %v1494
  %v1497 = vrot.slane %v1299, 2
  %v1498 = vsel %vm152, %v1497, %v1496
  %v1499 = vrot.slane %v1300, 1
  %v1500 = vsel %vm155, %v1499, %v1498
  %v1501 = vsel %vm158, %v1301, %v1500
  %v1502 = vrot.slane %v1302, 7
  %v1503 = vsel %vm161, %v1502, %v1501
  %v1504 = vrot.slane %v1303, 6
  %v1505 = vsel %vm164, %v1504, %v1503
  %v1506 = vpack.c.b16 %v1505, %v1505
  %1508 = vmatpush.bf16.msra.mxu0 %v292
  %1509 = vmatpush.bf16.msra.mxu0 %v288
  %1510 = vmatpush.bf16.msra.mxu0 %v284
  %1511 = vmatpush.bf16.msra.mxu0 %v280
  %1512 = vmatpush.bf16.msra.mxu0 %v276
  %1513 = vmatpush.bf16.msra.mxu0 %v272
  %1514 = vmatpush.bf16.msra.mxu0 %v268
  %1515 = vmatpush.bf16.msra.mxu0 %v264
  %1516 = vmatmul.bf16.gmra.mxu0 %v1506
  %v1517 = vpop.f32.mrf.mxu0
  %v1518 = vadd.f32 %v105, %v1517
  %v1519 = vpop.f32.mrf.mxu0
  %1520 = vdwg.mxu0
  %1521 = vmatpush.bf16.msra.mxu0 %v293
  %1522 = vmatpush.bf16.msra.mxu0 %v289
  %1523 = vmatpush.bf16.msra.mxu0 %v285
  %1524 = vmatpush.bf16.msra.mxu0 %v281
  %1525 = vmatpush.bf16.msra.mxu0 %v277
  %1526 = vmatpush.bf16.msra.mxu0 %v273
  %1527 = vmatpush.bf16.msra.mxu0 %v269
  %1528 = vmatpush.bf16.msra.mxu0 %v265
  %1529 = vmatmul.bf16.gmra.mxu0 %v1506
  %v1530 = vpop.f32.mrf.mxu0
  %v1531 = vadd.f32 %v106, %v1530
  %v1532 = vpop.f32.mrf.mxu0
  %1533 = vdwg.mxu0
  %1534 = vmatpush.bf16.msra.mxu0 %v294
  %1535 = vmatpush.bf16.msra.mxu0 %v290
  %1536 = vmatpush.bf16.msra.mxu0 %v286
  %1537 = vmatpush.bf16.msra.mxu0 %v282
  %1538 = vmatpush.bf16.msra.mxu0 %v278
  %1539 = vmatpush.bf16.msra.mxu0 %v274
  %1540 = vmatpush.bf16.msra.mxu0 %v270
  %1541 = vmatpush.bf16.msra.mxu0 %v266
  %1542 = vmatmul.bf16.gmra.mxu0 %v1506
  %v1543 = vpop.f32.mrf.mxu0
  %v1544 = vadd.f32 %v107, %v1543
  %v1545 = vpop.f32.mrf.mxu0
  %1546 = vdwg.mxu0
  %1547 = vmatpush.bf16.msra.mxu0 %v295
  %1548 = vmatpush.bf16.msra.mxu0 %v291
  %1549 = vmatpush.bf16.msra.mxu0 %v287
  %1550 = vmatpush.bf16.msra.mxu0 %v283
  %1551 = vmatpush.bf16.msra.mxu0 %v279
  %1552 = vmatpush.bf16.msra.mxu0 %v275
  %1553 = vmatpush.bf16.msra.mxu0 %v271
  %1554 = vmatpush.bf16.msra.mxu0 %v267
  %1555 = vmatmul.bf16.gmra.mxu0 %v1506
  %v1556 = vpop.f32.mrf.mxu0
  %v1557 = vadd.f32 %v108, %v1556
  %v1558 = vpop.f32.mrf.mxu0
  %1559 = vdwg.mxu0
  %v1560 = vpack.c.bf16 %v1491, %v1491
  %1561 = vmatpush.bf16.msra.mxu0 %v505
  %1562 = vmatpush.bf16.msra.mxu0 %v501
  %1563 = vmatpush.bf16.msra.mxu0 %v497
  %1564 = vmatpush.bf16.msra.mxu0 %v493
  %1565 = vmatpush.bf16.msra.mxu0 %v489
  %1566 = vmatpush.bf16.msra.mxu0 %v485
  %1567 = vmatpush.bf16.msra.mxu0 %v481
  %1568 = vmatpush.bf16.msra.mxu0 %v477
  %1569 = vmatmul.bf16.gmra.mxu0 %v1560
  %v1570 = vpop.f32.mrf.mxu0
  %v1571 = vadd.f32 0.0, %v1570
  %v1572 = vpop.f32.mrf.mxu0
  %1573 = vdwg.mxu0
  %1574 = vmatpush.bf16.msra.mxu0 %v506
  %1575 = vmatpush.bf16.msra.mxu0 %v502
  %1576 = vmatpush.bf16.msra.mxu0 %v498
  %1577 = vmatpush.bf16.msra.mxu0 %v494
  %1578 = vmatpush.bf16.msra.mxu0 %v490
  %1579 = vmatpush.bf16.msra.mxu0 %v486
  %1580 = vmatpush.bf16.msra.mxu0 %v482
  %1581 = vmatpush.bf16.msra.mxu0 %v478
  %1582 = vmatmul.bf16.gmra.mxu0 %v1560
  %v1583 = vpop.f32.mrf.mxu0
  %v1584 = vadd.f32 0.0, %v1583
  %v1585 = vpop.f32.mrf.mxu0
  %1586 = vdwg.mxu0
  %1587 = vmatpush.bf16.msra.mxu0 %v507
  %1588 = vmatpush.bf16.msra.mxu0 %v503
  %1589 = vmatpush.bf16.msra.mxu0 %v499
  %1590 = vmatpush.bf16.msra.mxu0 %v495
  %1591 = vmatpush.bf16.msra.mxu0 %v491
  %1592 = vmatpush.bf16.msra.mxu0 %v487
  %1593 = vmatpush.bf16.msra.mxu0 %v483
  %1594 = vmatpush.bf16.msra.mxu0 %v479
  %1595 = vmatmul.bf16.gmra.mxu0 %v1560
  %v1596 = vpop.f32.mrf.mxu0
  %v1597 = vadd.f32 0.0, %v1596
  %v1598 = vpop.f32.mrf.mxu0
  %1599 = vdwg.mxu0
  %1600 = vmatpush.bf16.msra.mxu0 %v508
  %1601 = vmatpush.bf16.msra.mxu0 %v504
  %1602 = vmatpush.bf16.msra.mxu0 %v500
  %1603 = vmatpush.bf16.msra.mxu0 %v496
  %1604 = vmatpush.bf16.msra.mxu0 %v492
  %1605 = vmatpush.bf16.msra.mxu0 %v488
  %1606 = vmatpush.bf16.msra.mxu0 %v484
  %1607 = vmatpush.bf16.msra.mxu0 %v480
  %1608 = vmatmul.bf16.gmra.mxu0 %v1560
  %v1609 = vpop.f32.mrf.mxu0
  %v1610 = vadd.f32 0.0, %v1609
  %v1611 = vpop.f32.mrf.mxu0
  %1612 = vdwg.mxu0
  %v1613 = vadd.f32 %v1518, %v1571
  %v1614 = vadd.f32 %v1531, %v1584
  %v1615 = vadd.f32 %v1544, %v1597
  %v1616 = vadd.f32 %v1557, %v1610
  %v1617 = vxor.u32 %v1613, 2147483648
  %v1618 = vmul.f32 %v1617, 1.442695
  %v1619 = vpow.pop %v1618
  %v1620 = vadd.f32 %v1619, 1.0
  %v1621 = vrcp.pop %v1620
  %v1622 = vmul.f32 %v1620, %v1621
  %v1623 = vsub.f32 1.0, %v1622
  %v1624 = vmul.f32 %v1621, %v1623
  %v1625 = vadd.f32 %v1621, %v1624
  %vm1626 = vweird.f32 %v1620
  %vm1627 = vweird.f32 %v1621
  %vm1628 = vmor %vm1626, %vm1627
  %v1629 = vsel %vm1628, %v1621, %v1625
  %v1630 = vand.u32 2147483647, %v1620
  %vm1631 = vcmp.eq.f32.partialorder %v1630, 8.507059e+37
  %v1632 = vand.u32 %v1620, 2147483648
  %v1633 = vor.u32 1.1754944e-38, %v1632
  %v1634 = vsel %vm1631, %v1633, %v1629
  %v1635 = vmul.f32 1.0, %v1634
  %v1636 = vxor.u32 %v1614, 2147483648
  %v1637 = vmul.f32 %v1636, 1.442695
  %v1638 = vpow.pop %v1637
  %v1639 = vadd.f32 %v1638, 1.0
  %v1640 = vrcp.pop %v1639
  %v1641 = vmul.f32 %v1639, %v1640
  %v1642 = vsub.f32 1.0, %v1641
  %v1643 = vmul.f32 %v1640, %v1642
  %v1644 = vadd.f32 %v1640, %v1643
  %vm1645 = vweird.f32 %v1639
  %vm1646 = vweird.f32 %v1640
  %vm1647 = vmor %vm1645, %vm1646
  %v1648 = vsel %vm1647, %v1640, %v1644
  %v1649 = vand.u32 2147483647, %v1639
  %vm1650 = vcmp.eq.f32.partialorder %v1649, 8.507059e+37
  %v1651 = vand.u32 %v1639, 2147483648
  %v1652 = vor.u32 1.1754944e-38, %v1651
  %v1653 = vsel %vm1650, %v1652, %v1648
  %v1654 = vmul.f32 1.0, %v1653
  %v1655 = vtanh.pop %v1615
  %v1656 = vxor.u32 %v1616, 2147483648
  %v1657 = vmul.f32 %v1656, 1.442695
  %v1658 = vpow.pop %v1657
  %v1659 = vadd.f32 %v1658, 1.0
  %v1660 = vrcp.pop %v1659
  %v1661 = vmul.f32 %v1659, %v1660
  %v1662 = vsub.f32 1.0, %v1661
  %v1663 = vmul.f32 %v1660, %v1662
  %v1664 = vadd.f32 %v1660, %v1663
  %vm1665 = vweird.f32 %v1659
  %vm1666 = vweird.f32 %v1660
  %vm1667 = vmor %vm1665, %vm1666
  %v1668 = vsel %vm1667, %v1660, %v1664
  %v1669 = vand.u32 2147483647, %v1659
  %vm1670 = vcmp.eq.f32.partialorder %v1669, 8.507059e+37
  %v1671 = vand.u32 %v1659, 2147483648
  %v1672 = vor.u32 1.1754944e-38, %v1671
  %v1673 = vsel %vm1670, %v1672, %v1668
  %v1674 = vmul.f32 1.0, %v1673
  %v1675 = vmul.f32 %v1654, %v1489
  %v1676 = vmul.f32 %v1635, %v1655
  %v1677 = vadd.f32 %v1675, %v1676
  %v1678 = vtanh.pop %v1677
  %v1679 = vmul.f32 %v1674, %v1678
  %v1680 = vld [vmem:[%s0] sm:$0x8]
  %v1681 = vld [vmem:[%s0 + $0x4] sm:$0x8]
  %v1682 = vld [vmem:[%s0 + $0x8] sm:$0x8]
  %v1683 = vld [vmem:[%s0 + $0xc] sm:$0x8]
  %v1684 = vld [vmem:[%s0 + $0x10] sm:$0x8]
  %v1685 = vld [vmem:[%s0 + $0x14] sm:$0x8]
  %v1686 = vld [vmem:[%s0 + $0x18] sm:$0x8]
  %v1687 = vld [vmem:[%s0 + $0x1c] sm:$0x8]
  %v1696 = vunpack.c.l.b16 %v1680
  %v1697 = vunpack.c.l.b16 %v1681
  %v1698 = vunpack.c.l.b16 %v1682
  %v1699 = vunpack.c.l.b16 %v1683
  %v1700 = vunpack.c.l.b16 %v1684
  %v1701 = vunpack.c.l.b16 %v1685
  %v1702 = vunpack.c.l.b16 %v1686
  %v1703 = vunpack.c.l.b16 %v1687
  %v1704 = vpack.c.b16 %v1696, %v1696
  %v1705 = vpack.c.b16 %v1697, %v1697
  %v1706 = vpack.c.b16 %v1698, %v1698
  %v1707 = vpack.c.b16 %v1699, %v1699
  %v1708 = vpack.c.b16 %v1700, %v1700
  %v1709 = vpack.c.b16 %v1701, %v1701
  %v1710 = vpack.c.b16 %v1702, %v1702
  %v1711 = vpack.c.b16 %v1703, %v1703
  %v1712 = vunpack.c.l.b16 %v1704
  %v1713 = vunpack.c.l.b16 %v1705
  %v1714 = vunpack.c.l.b16 %v1706
  %v1715 = vunpack.c.l.b16 %v1707
  %v1716 = vunpack.c.l.b16 %v1708
  %v1717 = vunpack.c.l.b16 %v1709
  %v1718 = vunpack.c.l.b16 %v1710
  %v1719 = vunpack.c.l.b16 %v1711
  %v1720 = vrot.slane %v1712, 6
  %v1721 = vrot.slane %v1713, 5
  %v1722 = vsel %vm146, %v1721, %v1720
  %v1723 = vrot.slane %v1714, 4
  %v1724 = vsel %vm149, %v1723, %v1722
  %v1725 = vrot.slane %v1715, 3
  %v1726 = vsel %vm152, %v1725, %v1724
  %v1727 = vrot.slane %v1716, 2
  %v1728 = vsel %vm155, %v1727, %v1726
  %v1729 = vrot.slane %v1717, 1
  %v1730 = vsel %vm158, %v1729, %v1728
  %v1731 = vsel %vm161, %v1718, %v1730
  %v1732 = vrot.slane %v1719, 7
  %v1733 = vsel %vm164, %v1732, %v1731
  %v1734 = vpack.c.b16 %v1733, %v1733
  %1736 = vmatpush.bf16.msra.mxu0 %v292
  %1737 = vmatpush.bf16.msra.mxu0 %v288
  %1738 = vmatpush.bf16.msra.mxu0 %v284
  %1739 = vmatpush.bf16.msra.mxu0 %v280
  %1740 = vmatpush.bf16.msra.mxu0 %v276
  %1741 = vmatpush.bf16.msra.mxu0 %v272
  %1742 = vmatpush.bf16.msra.mxu0 %v268
  %1743 = vmatpush.bf16.msra.mxu0 %v264
  %1744 = vmatmul.bf16.gmra.mxu0 %v1734
  %v1745 = vpop.f32.mrf.mxu0
  %v1746 = vadd.f32 %v105, %v1745
  %v1747 = vpop.f32.mrf.mxu0
  %1748 = vdwg.mxu0
  %1749 = vmatpush.bf16.msra.mxu0 %v293
  %1750 = vmatpush.bf16.msra.mxu0 %v289
  %1751 = vmatpush.bf16.msra.mxu0 %v285
  %1752 = vmatpush.bf16.msra.mxu0 %v281
  %1753 = vmatpush.bf16.msra.mxu0 %v277
  %1754 = vmatpush.bf16.msra.mxu0 %v273
  %1755 = vmatpush.bf16.msra.mxu0 %v269
  %1756 = vmatpush.bf16.msra.mxu0 %v265
  %1757 = vmatmul.bf16.gmra.mxu0 %v1734
  %v1758 = vpop.f32.mrf.mxu0
  %v1759 = vadd.f32 %v106, %v1758
  %v1760 = vpop.f32.mrf.mxu0
  %1761 = vdwg.mxu0
  %1762 = vmatpush.bf16.msra.mxu0 %v294
  %1763 = vmatpush.bf16.msra.mxu0 %v290
  %1764 = vmatpush.bf16.msra.mxu0 %v286
  %1765 = vmatpush.bf16.msra.mxu0 %v282
  %1766 = vmatpush.bf16.msra.mxu0 %v278
  %1767 = vmatpush.bf16.msra.mxu0 %v274
  %1768 = vmatpush.bf16.msra.mxu0 %v270
  %1769 = vmatpush.bf16.msra.mxu0 %v266
  %1770 = vmatmul.bf16.gmra.mxu0 %v1734
  %v1771 = vpop.f32.mrf.mxu0
  %v1772 = vadd.f32 %v107, %v1771
  %v1773 = vpop.f32.mrf.mxu0
  %1774 = vdwg.mxu0
  %1775 = vmatpush.bf16.msra.mxu0 %v295
  %1776 = vmatpush.bf16.msra.mxu0 %v291
  %1777 = vmatpush.bf16.msra.mxu0 %v287
  %1778 = vmatpush.bf16.msra.mxu0 %v283
  %1779 = vmatpush.bf16.msra.mxu0 %v279
  %1780 = vmatpush.bf16.msra.mxu0 %v275
  %1781 = vmatpush.bf16.msra.mxu0 %v271
  %1782 = vmatpush.bf16.msra.mxu0 %v267
  %1783 = vmatmul.bf16.gmra.mxu0 %v1734
  %v1784 = vpop.f32.mrf.mxu0
  %v1785 = vadd.f32 %v108, %v1784
  %v1786 = vpop.f32.mrf.mxu0
  %1787 = vdwg.mxu0
  %v1788 = vpack.c.bf16 %v1679, %v1679
  %1789 = vmatpush.bf16.msra.mxu0 %v505
  %1790 = vmatpush.bf16.msra.mxu0 %v501
  %1791 = vmatpush.bf16.msra.mxu0 %v497
  %1792 = vmatpush.bf16.msra.mxu0 %v493
  %1793 = vmatpush.bf16.msra.mxu0 %v489
  %1794 = vmatpush.bf16.msra.mxu0 %v485
  %1795 = vmatpush.bf16.msra.mxu0 %v481
  %1796 = vmatpush.bf16.msra.mxu0 %v477
  %1797 = vmatmul.bf16.gmra.mxu0 %v1788
  %v1798 = vpop.f32.mrf.mxu0
  %v1799 = vadd.f32 0.0, %v1798
  %v1800 = vpop.f32.mrf.mxu0
  %1801 = vdwg.mxu0
  %1802 = vmatpush.bf16.msra.mxu0 %v506
  %1803 = vmatpush.bf16.msra.mxu0 %v502
  %1804 = vmatpush.bf16.msra.mxu0 %v498
  %1805 = vmatpush.bf16.msra.mxu0 %v494
  %1806 = vmatpush.bf16.msra.mxu0 %v490
  %1807 = vmatpush.bf16.msra.mxu0 %v486
  %1808 = vmatpush.bf16.msra.mxu0 %v482
  %1809 = vmatpush.bf16.msra.mxu0 %v478
  %1810 = vmatmul.bf16.gmra.mxu0 %v1788
  %v1811 = vpop.f32.mrf.mxu0
  %v1812 = vadd.f32 0.0, %v1811
  %v1813 = vpop.f32.mrf.mxu0
  %1814 = vdwg.mxu0
  %1815 = vmatpush.bf16.msra.mxu0 %v507
  %1816 = vmatpush.bf16.msra.mxu0 %v503
  %1817 = vmatpush.bf16.msra.mxu0 %v499
  %1818 = vmatpush.bf16.msra.mxu0 %v495
  %1819 = vmatpush.bf16.msra.mxu0 %v491
  %1820 = vmatpush.bf16.msra.mxu0 %v487
  %1821 = vmatpush.bf16.msra.mxu0 %v483
  %1822 = vmatpush.bf16.msra.mxu0 %v479
  %1823 = vmatmul.bf16.gmra.mxu0 %v1788
  %v1824 = vpop.f32.mrf.mxu0
  %v1825 = vadd.f32 0.0, %v1824
  %v1826 = vpop.f32.mrf.mxu0
  %1827 = vdwg.mxu0
  %1828 = vmatpush.bf16.msra.mxu0 %v508
  %1829 = vmatpush.bf16.msra.mxu0 %v504
  %1830 = vmatpush.bf16.msra.mxu0 %v500
  %1831 = vmatpush.bf16.msra.mxu0 %v496
  %1832 = vmatpush.bf16.msra.mxu0 %v492
  %1833 = vmatpush.bf16.msra.mxu0 %v488
  %1834 = vmatpush.bf16.msra.mxu0 %v484
  %1835 = vmatpush.bf16.msra.mxu0 %v480
  %1836 = vmatmul.bf16.gmra.mxu0 %v1788
  %v1837 = vpop.f32.mrf.mxu0
  %v1838 = vadd.f32 0.0, %v1837
  %v1839 = vpop.f32.mrf.mxu0
  %1840 = vdwg.mxu0
  %v1841 = vadd.f32 %v1746, %v1799
  %v1842 = vadd.f32 %v1759, %v1812
  %v1843 = vadd.f32 %v1772, %v1825
  %v1844 = vadd.f32 %v1785, %v1838
  %v1845 = vxor.u32 %v1841, 2147483648
  %v1846 = vmul.f32 %v1845, 1.442695
  %v1847 = vpow.pop %v1846
  %v1848 = vadd.f32 %v1847, 1.0
  %v1849 = vrcp.pop %v1848
  %v1850 = vmul.f32 %v1848, %v1849
  %v1851 = vsub.f32 1.0, %v1850
  %v1852 = vmul.f32 %v1849, %v1851
  %v1853 = vadd.f32 %v1849, %v1852
  %vm1854 = vweird.f32 %v1848
  %vm1855 = vweird.f32 %v1849
  %vm1856 = vmor %vm1854, %vm1855
  %v1857 = vsel %vm1856, %v1849, %v1853
  %v1858 = vand.u32 2147483647, %v1848
  %vm1859 = vcmp.eq.f32.partialorder %v1858, 8.507059e+37
  %v1860 = vand.u32 %v1848, 2147483648
  %v1861 = vor.u32 1.1754944e-38, %v1860
  %v1862 = vsel %vm1859, %v1861, %v1857
  %v1863 = vmul.f32 1.0, %v1862
  %v1864 = vxor.u32 %v1842, 2147483648
  %v1865 = vmul.f32 %v1864, 1.442695
  %v1866 = vpow.pop %v1865
  %v1867 = vadd.f32 %v1866, 1.0
  %v1868 = vrcp.pop %v1867
  %v1869 = vmul.f32 %v1867, %v1868
  %v1870 = vsub.f32 1.0, %v1869
  %v1871 = vmul.f32 %v1868, %v1870
  %v1872 = vadd.f32 %v1868, %v1871
  %vm1873 = vweird.f32 %v1867
  %vm1874 = vweird.f32 %v1868
  %vm1875 = vmor %vm1873, %vm1874
  %v1876 = vsel %vm1875, %v1868, %v1872
  %v1877 = vand.u32 2147483647, %v1867
  %vm1878 = vcmp.eq.f32.partialorder %v1877, 8.507059e+37
  %v1879 = vand.u32 %v1867, 2147483648
  %v1880 = vor.u32 1.1754944e-38, %v1879
  %v1881 = vsel %vm1878, %v1880, %v1876
  %v1882 = vmul.f32 1.0, %v1881
  %v1883 = vtanh.pop %v1843
  %v1884 = vxor.u32 %v1844, 2147483648
  %v1885 = vmul.f32 %v1884, 1.442695
  %v1886 = vpow.pop %v1885
  %v1887 = vadd.f32 %v1886, 1.0
  %v1888 = vrcp.pop %v1887
  %v1889 = vmul.f32 %v1887, %v1888
  %v1890 = vsub.f32 1.0, %v1889
  %v1891 = vmul.f32 %v1888, %v1890
  %v1892 = vadd.f32 %v1888, %v1891
  %vm1893 = vweird.f32 %v1887
  %vm1894 = vweird.f32 %v1888
  %vm1895 = vmor %vm1893, %vm1894
  %v1896 = vsel %vm1895, %v1888, %v1892
  %v1897 = vand.u32 2147483647, %v1887
  %vm1898 = vcmp.eq.f32.partialorder %v1897, 8.507059e+37
  %v1899 = vand.u32 %v1887, 2147483648
  %v1900 = vor.u32 1.1754944e-38, %v1899
  %v1901 = vsel %vm1898, %v1900, %v1896
  %v1902 = vmul.f32 1.0, %v1901
  %v1903 = vmul.f32 %v1882, %v1677
  %v1904 = vmul.f32 %v1863, %v1883
  %v1905 = vadd.f32 %v1903, %v1904
  %v1906 = vtanh.pop %v1905
  %v1907 = vmul.f32 %v1902, %v1906
  %v1908 = vrot.slane %v1712, 7
  %v1909 = vrot.slane %v1713, 6
  %v1910 = vsel %vm146, %v1909, %v1908
  %v1911 = vrot.slane %v1714, 5
  %v1912 = vsel %vm149, %v1911, %v1910
  %v1913 = vrot.slane %v1715, 4
  %v1914 = vsel %vm152, %v1913, %v1912
  %v1915 = vrot.slane %v1716, 3
  %v1916 = vsel %vm155, %v1915, %v1914
  %v1917 = vrot.slane %v1717, 2
  %v1918 = vsel %vm158, %v1917, %v1916
  %v1919 = vrot.slane %v1718, 1
  %v1920 = vsel %vm161, %v1919, %v1918
  %v1921 = vsel %vm164, %v1719, %v1920
  %v1922 = vpack.c.b16 %v1921, %v1921
  %1924 = vmatpush.bf16.msra.mxu0 %v292
  %1925 = vmatpush.bf16.msra.mxu0 %v288
  %1926 = vmatpush.bf16.msra.mxu0 %v284
  %1927 = vmatpush.bf16.msra.mxu0 %v280
  %1928 = vmatpush.bf16.msra.mxu0 %v276
  %1929 = vmatpush.bf16.msra.mxu0 %v272
  %1930 = vmatpush.bf16.msra.mxu0 %v268
  %1931 = vmatpush.bf16.msra.mxu0 %v264
  %1932 = vmatmul.bf16.gmra.mxu0 %v1922
  %v1933 = vpop.f32.mrf.mxu0
  %v1934 = vadd.f32 %v105, %v1933
  %v1935 = vpop.f32.mrf.mxu0
  %1936 = vdwg.mxu0
  %1937 = vmatpush.bf16.msra.mxu0 %v293
  %1938 = vmatpush.bf16.msra.mxu0 %v289
  %1939 = vmatpush.bf16.msra.mxu0 %v285
  %1940 = vmatpush.bf16.msra.mxu0 %v281
  %1941 = vmatpush.bf16.msra.mxu0 %v277
  %1942 = vmatpush.bf16.msra.mxu0 %v273
  %1943 = vmatpush.bf16.msra.mxu0 %v269
  %1944 = vmatpush.bf16.msra.mxu0 %v265
  %1945 = vmatmul.bf16.gmra.mxu0 %v1922
  %v1946 = vpop.f32.mrf.mxu0
  %v1947 = vadd.f32 %v106, %v1946
  %v1948 = vpop.f32.mrf.mxu0
  %1949 = vdwg.mxu0
  %1950 = vmatpush.bf16.msra.mxu0 %v294
  %1951 = vmatpush.bf16.msra.mxu0 %v290
  %1952 = vmatpush.bf16.msra.mxu0 %v286
  %1953 = vmatpush.bf16.msra.mxu0 %v282
  %1954 = vmatpush.bf16.msra.mxu0 %v278
  %1955 = vmatpush.bf16.msra.mxu0 %v274
  %1956 = vmatpush.bf16.msra.mxu0 %v270
  %1957 = vmatpush.bf16.msra.mxu0 %v266
  %1958 = vmatmul.bf16.gmra.mxu0 %v1922
  %v1959 = vpop.f32.mrf.mxu0
  %v1960 = vadd.f32 %v107, %v1959
  %v1961 = vpop.f32.mrf.mxu0
  %1962 = vdwg.mxu0
  %1963 = vmatpush.bf16.msra.mxu0 %v295
  %1964 = vmatpush.bf16.msra.mxu0 %v291
  %1965 = vmatpush.bf16.msra.mxu0 %v287
  %1966 = vmatpush.bf16.msra.mxu0 %v283
  %1967 = vmatpush.bf16.msra.mxu0 %v279
  %1968 = vmatpush.bf16.msra.mxu0 %v275
  %1969 = vmatpush.bf16.msra.mxu0 %v271
  %1970 = vmatpush.bf16.msra.mxu0 %v267
  %1971 = vmatmul.bf16.gmra.mxu0 %v1922
  %v1972 = vpop.f32.mrf.mxu0
  %v1973 = vadd.f32 %v108, %v1972
  %v1974 = vpop.f32.mrf.mxu0
  %1975 = vdwg.mxu0
  %v1976 = vpack.c.bf16 %v1907, %v1907
  %1977 = vmatpush.bf16.msra.mxu0 %v505
  %1978 = vmatpush.bf16.msra.mxu0 %v501
  %1979 = vmatpush.bf16.msra.mxu0 %v497
  %1980 = vmatpush.bf16.msra.mxu0 %v493
  %1981 = vmatpush.bf16.msra.mxu0 %v489
  %1982 = vmatpush.bf16.msra.mxu0 %v485
  %1983 = vmatpush.bf16.msra.mxu0 %v481
  %1984 = vmatpush.bf16.msra.mxu0 %v477
  %1985 = vmatmul.bf16.gmra.mxu0 %v1976
  %v1986 = vpop.f32.mrf.mxu0
  %v1987 = vadd.f32 0.0, %v1986
  %v1988 = vpop.f32.mrf.mxu0
  %1989 = vdwg.mxu0
  %1990 = vmatpush.bf16.msra.mxu0 %v506
  %1991 = vmatpush.bf16.msra.mxu0 %v502
  %1992 = vmatpush.bf16.msra.mxu0 %v498
  %1993 = vmatpush.bf16.msra.mxu0 %v494
  %1994 = vmatpush.bf16.msra.mxu0 %v490
  %1995 = vmatpush.bf16.msra.mxu0 %v486
  %1996 = vmatpush.bf16.msra.mxu0 %v482
  %1997 = vmatpush.bf16.msra.mxu0 %v478
  %1998 = vmatmul.bf16.gmra.mxu0 %v1976
  %v1999 = vpop.f32.mrf.mxu0
  %v2000 = vadd.f32 0.0, %v1999
  %v2001 = vpop.f32.mrf.mxu0
  %2002 = vdwg.mxu0
  %2003 = vmatpush.bf16.msra.mxu0 %v507
  %2004 = vmatpush.bf16.msra.mxu0 %v503
  %2005 = vmatpush.bf16.msra.mxu0 %v499
  %2006 = vmatpush.bf16.msra.mxu0 %v495
  %2007 = vmatpush.bf16.msra.mxu0 %v491
  %2008 = vmatpush.bf16.msra.mxu0 %v487
  %2009 = vmatpush.bf16.msra.mxu0 %v483
  %2010 = vmatpush.bf16.msra.mxu0 %v479
  %2011 = vmatmul.bf16.gmra.mxu0 %v1976
  %v2012 = vpop.f32.mrf.mxu0
  %v2013 = vadd.f32 0.0, %v2012
  %v2014 = vpop.f32.mrf.mxu0
  %2015 = vdwg.mxu0
  %2016 = vmatpush.bf16.msra.mxu0 %v508
  %2017 = vmatpush.bf16.msra.mxu0 %v504
  %2018 = vmatpush.bf16.msra.mxu0 %v500
  %2019 = vmatpush.bf16.msra.mxu0 %v496
  %2020 = vmatpush.bf16.msra.mxu0 %v492
  %2021 = vmatpush.bf16.msra.mxu0 %v488
  %2022 = vmatpush.bf16.msra.mxu0 %v484
  %2023 = vmatpush.bf16.msra.mxu0 %v480
  %2024 = vmatmul.bf16.gmra.mxu0 %v1976
  %v2025 = vpop.f32.mrf.mxu0
  %v2026 = vadd.f32 0.0, %v2025
  %v2027 = vpop.f32.mrf.mxu0
  %2028 = vdwg.mxu0
  %v2029 = vadd.f32 %v1934, %v1987
  %v2030 = vadd.f32 %v1947, %v2000
  %v2031 = vadd.f32 %v1960, %v2013
  %v2032 = vadd.f32 %v1973, %v2026
  %v2033 = vxor.u32 %v2029, 2147483648
  %v2034 = vmul.f32 %v2033, 1.442695
  %v2035 = vpow.pop %v2034
  %v2036 = vadd.f32 %v2035, 1.0
  %v2037 = vrcp.pop %v2036
  %v2038 = vmul.f32 %v2036, %v2037
  %v2039 = vsub.f32 1.0, %v2038
  %v2040 = vmul.f32 %v2037, %v2039
  %v2041 = vadd.f32 %v2037, %v2040
  %vm2042 = vweird.f32 %v2036
  %vm2043 = vweird.f32 %v2037
  %vm2044 = vmor %vm2042, %vm2043
  %v2045 = vsel %vm2044, %v2037, %v2041
  %v2046 = vand.u32 2147483647, %v2036
  %vm2047 = vcmp.eq.f32.partialorder %v2046, 8.507059e+37
  %v2048 = vand.u32 %v2036, 2147483648
  %v2049 = vor.u32 1.1754944e-38, %v2048
  %v2050 = vsel %vm2047, %v2049, %v2045
  %v2051 = vmul.f32 1.0, %v2050
  %v2052 = vxor.u32 %v2030, 2147483648
  %v2053 = vmul.f32 %v2052, 1.442695
  %v2054 = vpow.pop %v2053
  %v2055 = vadd.f32 %v2054, 1.0
  %v2056 = vrcp.pop %v2055
  %v2057 = vmul.f32 %v2055, %v2056
  %v2058 = vsub.f32 1.0, %v2057
  %v2059 = vmul.f32 %v2056, %v2058
  %v2060 = vadd.f32 %v2056, %v2059
  %vm2061 = vweird.f32 %v2055
  %vm2062 = vweird.f32 %v2056
  %vm2063 = vmor %vm2061, %vm2062
  %v2064 = vsel %vm2063, %v2056, %v2060
  %v2065 = vand.u32 2147483647, %v2055
  %vm2066 = vcmp.eq.f32.partialorder %v2065, 8.507059e+37
  %v2067 = vand.u32 %v2055, 2147483648
  %v2068 = vor.u32 1.1754944e-38, %v2067
  %v2069 = vsel %vm2066, %v2068, %v2064
  %v2070 = vmul.f32 1.0, %v2069
  %v2071 = vtanh.pop %v2031
  %v2072 = vxor.u32 %v2032, 2147483648
  %v2073 = vmul.f32 %v2072, 1.442695
  %v2074 = vpow.pop %v2073
  %v2075 = vadd.f32 %v2074, 1.0
  %v2076 = vrcp.pop %v2075
  %v2077 = vmul.f32 %v2075, %v2076
  %v2078 = vsub.f32 1.0, %v2077
  %v2079 = vmul.f32 %v2076, %v2078
  %v2080 = vadd.f32 %v2076, %v2079
  %vm2081 = vweird.f32 %v2075
  %vm2082 = vweird.f32 %v2076
  %vm2083 = vmor %vm2081, %vm2082
  %v2084 = vsel %vm2083, %v2076, %v2080
  %v2085 = vand.u32 2147483647, %v2075
  %vm2086 = vcmp.eq.f32.partialorder %v2085, 8.507059e+37
  %v2087 = vand.u32 %v2075, 2147483648
  %v2088 = vor.u32 1.1754944e-38, %v2087
  %v2089 = vsel %vm2086, %v2088, %v2084
  %v2090 = vmul.f32 1.0, %v2089
  %v2091 = vmul.f32 %v2070, %v1905
  %v2092 = vmul.f32 %v2051, %v2071
  %v2093 = vadd.f32 %v2091, %v2092
  %v2094 = vtanh.pop %v2093
  %v2095 = vmul.f32 %v2090, %v2094
  %2096 = vst [vmem:[#allocation2] sm:$0xff] %v2095
  %2097 = vst [vmem:[#allocation3] sm:$0xff] %v2093
  // Predicated region
  $region30: #{rnn_forward.1} parent=0 // pred_check
    %p2098 = pneg %p23
  $region31: #{rnn_forward.1} parent=0 // pred_check_branch
    %2100 = sbr.rel (%p2098) target = $region33
  $region32: #{rnn_forward.1} parent=0 // pred_region
    %v2101 = vpack.c.bf16 %v2095, %v2095
    %v2102 = vld [vmem:[%s4] sm:$0xf]
    %v2103 = vld [vmem:[%s4 + $0x4] sm:$0xf]
    %v2104 = vld [vmem:[%s4 + $0x8] sm:$0xf]
    %v2105 = vld [vmem:[%s4 + $0xc] sm:$0xf]
    %v2106 = vld [vmem:[%s4 + $0x10] sm:$0xf]
    %v2107 = vld [vmem:[%s4 + $0x14] sm:$0xf]
    %v2108 = vld [vmem:[%s4 + $0x18] sm:$0xf]
    %v2109 = vld [vmem:[%s4 + $0x1c] sm:$0xf]
    %v2110 = vld [vmem:[%s4 + $0x20] sm:$0xf]
    %v2111 = vld [vmem:[%s4 + $0x24] sm:$0xf]
    %v2112 = vld [vmem:[%s4 + $0x28] sm:$0xf]
    %v2113 = vld [vmem:[%s4 + $0x2c] sm:$0xf]
    %v2114 = vld [vmem:[%s4 + $0x30] sm:$0xf]
    %v2115 = vld [vmem:[%s4 + $0x34] sm:$0xf]
    %v2116 = vld [vmem:[%s4 + $0x38] sm:$0xf]
    %v2117 = vld [vmem:[%s4 + $0x3c] sm:$0xf]
    %v2118 = vld [vmem:[%s5] sm:$0x1]
    %v2120 = vperm.slane %v2118, 0
    %v2138 = vunpack.c.l.b16 %v2102
    %v2139 = vunpack.c.l.b16 %v2103
    %v2140 = vunpack.c.l.b16 %v2104
    %v2141 = vunpack.c.l.b16 %v2105
    %v2142 = vunpack.c.l.b16 %v2106
    %v2143 = vunpack.c.l.b16 %v2107
    %v2144 = vunpack.c.l.b16 %v2108
    %v2145 = vunpack.c.l.b16 %v2109
    %v2146 = vunpack.c.l.b16 %v2110
    %v2147 = vunpack.c.l.b16 %v2111
    %v2148 = vunpack.c.l.b16 %v2112
    %v2149 = vunpack.c.l.b16 %v2113
    %v2150 = vunpack.c.l.b16 %v2114
    %v2151 = vunpack.c.l.b16 %v2115
    %v2152 = vunpack.c.l.b16 %v2116
    %v2153 = vunpack.c.l.b16 %v2117
    %v2154 = vpack.c.b16 %v2139, %v2138
    %v2155 = vpack.c.b16 %v2141, %v2140
    %v2156 = vpack.c.b16 %v2143, %v2142
    %v2157 = vpack.c.b16 %v2145, %v2144
    %v2158 = vpack.c.b16 %v2147, %v2146
    %v2159 = vpack.c.b16 %v2149, %v2148
    %v2160 = vpack.c.b16 %v2151, %v2150
    %v2161 = vpack.c.b16 %v2153, %v2152
    %2170 = vmatpush.bf16.msra.mxu0 %v2161
    %2171 = vmatpush.bf16.msra.mxu0 %v2160
    %2172 = vmatpush.bf16.msra.mxu0 %v2159
    %2173 = vmatpush.bf16.msra.mxu0 %v2158
    %2174 = vmatpush.bf16.msra.mxu0 %v2157
    %2175 = vmatpush.bf16.msra.mxu0 %v2156
    %2176 = vmatpush.bf16.msra.mxu0 %v2155
    %2177 = vmatpush.bf16.msra.mxu0 %v2154
    %2178 = vmatmul.bf16.gmra.mxu0 %v2101
    %v2179 = vpop.f32.mrf.mxu0
    %v2180 = vadd.f32 %v2120, %v2179
    %v2181 = vpop.f32.mrf.mxu0
    %2182 = vdwg.mxu0
    %2183 = vst [vmem:[%s6] sm:$0xff] %v2180
  $region33: #{rnn_forward.1} parent=0 // pred_fallthru
    _
  // Predicated region
  $region34: #{rnn_forward.1} parent=0 // pred_check
    _
  $region35: #{rnn_forward.1} parent=0 // pred_check_branch
    %2185 = sbr.rel (0) target = $region37
  $region36: #{rnn_forward.1} parent=0 // pred_region
    _
  $region37: #{rnn_forward.1} parent=0 // pred_fallthru
    _
  // Predicated region
  $region38: #{rnn_forward.1} parent=0 // pred_check
    _
  $region39: #{rnn_forward.1} parent=0 // pred_check_branch
    %2187 = sbr.rel (0) target = $region41
  $region40: #{rnn_forward.1} parent=0 // pred_region
    _
  $region41: #{rnn_forward.1} parent=0 // pred_fallthru
    _

</llo_original>
